<compile_context>
chip_gen: v5e
topology: v5e:2x2
jax: 0.10.0
libtpu: 0.0.40
codegen_flags: <defaults>
</compile_context>

<pallas_src>
import jax
import jax.numpy as jnp
from jax.experimental import pallas as pl
from jax.experimental.pallas import tpu as pltpu


# ---------------------------------------------------------------------------
# Kernel 1: stride-2 KxK conv (+ fused ReLU) via row-tap accumulation.
# ---------------------------------------------------------------------------
def _conv_rowtap_kernel(a_ref, w_ref, o_ref, acc_ref):
    # a_ref  : [G, 2*Cin]              one padded input row, width paired into channels (bf16)
    # w_ref  : [KH, GOFF, 2*Cin, Cout] packed weights, resident in VMEM (bf16)
    # o_ref  : [Wo, Cout]              one output row
    # acc_ref: [Wo, Cout] f32          accumulator across the KH grid axis
    i = pl.program_id(2)

    @pl.when(i == 0)
    def _init():
        acc_ref[...] = jnp.zeros_like(acc_ref)

    a = a_ref[...]
    wo = acc_ref.shape[0]
    goff = w_ref.shape[1]
    part = jnp.zeros(acc_ref.shape, jnp.float32)
    for g in range(goff):                       # static, GOFF in {2, 4}
        part += jnp.dot(a[g:g + wo, :], w_ref[i, g],
                        preferred_element_type=jnp.float32)
    acc_ref[...] += part

    @pl.when(i == pl.num_programs(2) - 1)
    def _finalize():
        o_ref[...] = jnp.maximum(acc_ref[...], 0.0).astype(o_ref.dtype)


def _pack_conv_weights(w):
    """HWIO [KH,KW,C,Cout] -> [KH, GOFF, 2C, Cout], column taps paired (odd tap
    of the last pair zero-padded)."""
    KH, KW, C, Cout = w.shape
    goff = (KW + 1) // 2
    w_pad = jnp.pad(w, ((0, 0), (0, 2 * goff - KW), (0, 0), (0, 0)))
    return w_pad.reshape(KH, goff, 2 * C, Cout)


def conv_s2_relu(x, w, padding, *, out_dtype=jnp.bfloat16):
    """KxK / stride-2 conv (no bias) + ReLU.  x: NHWC, w: HWIO."""
    N, H, W, C = x.shape
    KH, KW, Cin, Cout = w.shape
    assert C == Cin
    Hp, Wp = H + 2 * padding, W + 2 * padding
    Ho = (Hp - KH) // 2 + 1
    Wo = (Wp - KW) // 2 + 1

    extra = Wp % 2                                  # make padded width even for pairing
    xp = jnp.pad(x.astype(jnp.bfloat16),
                 ((0, 0), (padding, padding), (padding, padding + extra), (0, 0)))
    Wp += extra
    G = Wp // 2
    C2 = 2 * C
    xpair = xp.reshape(N, Hp, G, C2)                # free row-major reshape, no copy

    goff = (KW + 1) // 2
    w_taps = _pack_conv_weights(w.astype(jnp.bfloat16))   # [KH, goff, 2C, Cout]

    return pl.pallas_call(
        _conv_rowtap_kernel,
        out_shape=jax.ShapeDtypeStruct((N, Ho, Wo, Cout), out_dtype),
        grid=(N, Ho, KH),
        in_specs=[
            # one padded input row per step: row index = 2*out_row + row_tap
            pl.BlockSpec((None, None, G, C2), lambda n, h, i: (n, 2 * h + i, 0, 0)),
            # whole packed weight stays resident in VMEM (constant block index)
            pl.BlockSpec((KH, goff, C2, Cout), lambda n, h, i: (0, 0, 0, 0)),
        ],
        out_specs=pl.BlockSpec((None, None, Wo, Cout), lambda n, h, i: (n, h, 0, 0)),
        scratch_shapes=[pltpu.VMEM((Wo, Cout), jnp.float32)],
        compiler_params=pltpu.CompilerParams(
            dimension_semantics=("parallel", "parallel", "arbitrary")),
    )(xpair, w_taps)


# ---------------------------------------------------------------------------
# Kernel 2: 1x1 conv (+ fused ReLU) as a tiled, lane-dense matmul.
# ---------------------------------------------------------------------------
def _matmul_relu_kernel(a_ref, w_ref, o_ref):
    o_ref[...] = jnp.maximum(
        jnp.dot(a_ref[...], w_ref[...], preferred_element_type=jnp.float32),
        0.0).astype(o_ref.dtype)


def conv1x1_relu(x, w, *, out_dtype=jnp.float32, block_m=512):
    """1x1 / stride-1 conv (no bias) + ReLU.  x: NHWC, w: HWIO [1,1,C,Cout]."""
    N, H, W, C = x.shape
    Cout = w.shape[-1]
    M = N * H * W
    a = x.reshape(M, C).astype(jnp.bfloat16)
    wm = w.reshape(C, Cout).astype(jnp.bfloat16)
    tm = min(block_m, M)

    out = pl.pallas_call(
        _matmul_relu_kernel,
        out_shape=jax.ShapeDtypeStruct((M, Cout), out_dtype),
        grid=(pl.cdiv(M, tm),),
        in_specs=[pl.BlockSpec((tm, C), lambda m: (m, 0)),
                  pl.BlockSpec((C, Cout), lambda m: (0, 0))],
        out_specs=pl.BlockSpec((tm, Cout), lambda m: (m, 0)),
        compiler_params=pltpu.CompilerParams(
            dimension_semantics=("parallel",)),
    )(a, wm)
    return out.reshape(N, H, W, Cout)


# ---------------------------------------------------------------------------
# SpatialPath forward (matches the PyTorch module: conv1 -> conv2 -> conv3 -> conv_out)
# ---------------------------------------------------------------------------
def spatial_path_forward(x_nchw, params):
    x = jnp.transpose(x_nchw, (0, 2, 3, 1)).astype(jnp.bfloat16)      # NCHW -> NHWC
    feat = conv_s2_relu(x,    params["conv1"], padding=3)             # 7x7/s2,  3 -> 64
    feat = conv_s2_relu(feat, params["conv2"], padding=1)             # 3x3/s2, 64 -> 64
    feat = conv_s2_relu(feat, params["conv3"], padding=1)             # 3x3/s2, 64 -> 64
    feat = conv1x1_relu(feat, params["conv_out"], out_dtype=jnp.float32)  # 1x1, 64 -> 128
    return jnp.transpose(feat, (0, 3, 1, 2))                          # NHWC -> NCHW


# ---------------------------------------------------------------------------
# Pure-JAX reference (same bf16-in / f32-accumulate recipe) for validation.
# ---------------------------------------------------------------------------
def spatial_path_reference(x_nchw, params):
    x = jnp.transpose(x_nchw, (0, 2, 3, 1)).astype(jnp.bfloat16)

    def conv_relu(h, w, stride, padding):
        out = jax.lax.conv_general_dilated(
            h, w.astype(jnp.bfloat16),
            window_strides=(stride, stride),
            padding=((padding, padding), (padding, padding)),
            dimension_numbers=("NHWC", "HWIO", "NHWC"),
            preferred_element_type=jnp.float32)
        return jnp.maximum(out, 0.0)

    h = conv_relu(x, params["conv1"], 2, 3).astype(jnp.bfloat16)
    h = conv_relu(h, params["conv2"], 2, 1).astype(jnp.bfloat16)
    h = conv_relu(h, params["conv3"], 2, 1).astype(jnp.bfloat16)
    h = conv_relu(h, params["conv_out"], 1, 0).astype(jnp.float32)
    return jnp.transpose(h, (0, 3, 1, 2))


# ---------------------------------------------------------------------------
# Deterministic synthetic parameters (shapes from SpatialPath.__init__).
# ---------------------------------------------------------------------------
def init_params(key):
    k1, k2, k3, k4 = jax.random.split(key, 4)

    def conv_w(k, kh, kw, cin, cout):
        fan_in = kh * kw * cin
        return (jax.random.normal(k, (kh, kw, cin, cout), jnp.float32)
                / jnp.sqrt(jnp.float32(fan_in)))

    return {
        "conv1":    conv_w(k1, 7, 7, 3, 64),
        "conv2":    conv_w(k2, 3, 3, 64, 64),
        "conv3":    conv_w(k3, 3, 3, 64, 64),
        "conv_out": conv_w(k4, 1, 1, 64, 128),
    }


# ---------------------------------------------------------------------------
if __name__ == "__main__":
    key = jax.random.PRNGKey(0)
    kx, kp = jax.random.split(key)
    x = jax.random.normal(kx, (2, 3, 64, 64), jnp.float32)   # NCHW like PyTorch
    params = init_params(kp)

    fwd = jax.jit(spatial_path_forward)
    out = fwd(x, params)
    jax.block_until_ready(out)

    assert out.shape == (2, 128, 8, 8), out.shape
    assert bool(jnp.all(jnp.isfinite(out)))

    ref = jax.jit(spatial_path_reference)(x, params)
    jax.block_until_ready(ref)
    assert bool(jnp.allclose(out, ref, rtol=5e-2, atol=5e-2)), \
        float(jnp.max(jnp.abs(out - ref)))

    print("KERNEL_OK")
</pallas_src>

<mosaic_0001>
module attributes {stable_mosaic.version = 11 : i64} {
  func.func @_conv_rowtap_kernel(%arg0: i32, %arg1: i32, %arg2: i32, %arg3: memref<1x1x35x6xbf16, #tpu.memory_space<vmem>>, %arg4: memref<7x4x6x64xbf16, #tpu.memory_space<vmem>>, %arg5: memref<1x1x32x64xbf16, #tpu.memory_space<vmem>>, %arg6: memref<32x64xf32, #tpu.memory_space<vmem>>) attributes {dimension_semantics = [#tpu.dimension_semantics<parallel>, #tpu.dimension_semantics<parallel>, #tpu.dimension_semantics<arbitrary>], iteration_bounds = array<i64: 2, 32, 7>, scalar_prefetch = 0 : i64, scratch_operands = 1 : i64, tpu.core_type = #tpu.core_type<tc>, window_params = [{transform_indices = @transform_0, window_bounds = array<i64: 1, 1, 35, 6>}, {pipeline_mode = #tpu.pipeline_mode<synchronous>, transform_indices = @transform_1, window_bounds = array<i64: 7, 4, 6, 64>}, {transform_indices = @transform_2, window_bounds = array<i64: 1, 1, 32, 64>}]} {
    %c0_i32 = arith.constant 0 : i32
    %0 = arith.cmpi eq, %arg2, %c0_i32 : i32
    %1 = arith.extui %0 : i1 to i32
    %c0_i32_0 = arith.constant 0 : i32
    %2 = arith.cmpi ne, %1, %c0_i32_0 : i32
    scf.if %2 {
      %cst_22 = arith.constant 0.000000e+00 : f32
      %36 = vector.broadcast %cst_22 : f32 to vector<32x64xf32>
      %c0_23 = arith.constant 0 : index
      %c0_24 = arith.constant 0 : index
      %37 = vector.load %arg6[%c0_23, %c0_24] : memref<32x64xf32, #tpu.memory_space<vmem>>, vector<32x64xf32>
      tpu.vector_store %arg6[%c0_23, %c0_24], %36 {strides = array<i32>} : memref<32x64xf32, #tpu.memory_space<vmem>>, vector<32x64xf32>,
    } else {
    }
    %c0 = arith.constant 0 : index
    %c0_1 = arith.constant 0 : index
    %c0_2 = arith.constant 0 : index
    %c0_3 = arith.constant 0 : index
    %3 = vector.load %arg3[%c0, %c0_1, %c0_2, %c0_3] : memref<1x1x35x6xbf16, #tpu.memory_space<vmem>>, vector<1x1x35x6xbf16>
    %4 = vector.shape_cast %3 : vector<1x1x35x6xbf16> to vector<35x6xbf16>
    %cst = arith.constant 0.000000e+00 : f32
    %5 = vector.broadcast %cst : f32 to vector<32x64xf32>
    %6 = vector.extract_strided_slice %4 {offsets = [0, 0], sizes = [32, 6], strides = [1, 1]} : vector<35x6xbf16> to vector<32x6xbf16>
    %7 = arith.index_cast %arg2 : i32 to index
    %c0_4 = arith.constant 0 : index
    %c0_5 = arith.constant 0 : index
    %c0_6 = arith.constant 0 : index
    %8 = vector.load %arg4[%7, %c0_4, %c0_5, %c0_6] : memref<7x4x6x64xbf16, #tpu.memory_space<vmem>>, vector<1x1x6x64xbf16>
    %9 = vector.shape_cast %8 : vector<1x1x6x64xbf16> to vector<6x64xbf16>
    %cst_7 = arith.constant dense<0.000000e+00> : vector<32x64xf32>
    %10 = tpu.matmul %6, %9, %cst_7 {dimension_numbers = #tpu.dot_dimension_numbers<[1], [0], [0], [1], [0, 0, 1, 1], [], []>} : vector<32x6xbf16>, vector<6x64xbf16>, vector<32x64xf32> -> vector<32x64xf32>
    %11 = arith.addf %5, %10 : vector<32x64xf32>
    %12 = vector.extract_strided_slice %4 {offsets = [1, 0], sizes = [32, 6], strides = [1, 1]} : vector<35x6xbf16> to vector<32x6xbf16>
    %13 = arith.index_cast %arg2 : i32 to index
    %c1 = arith.constant 1 : index
    %c0_8 = arith.constant 0 : index
    %c0_9 = arith.constant 0 : index
    %14 = vector.load %arg4[%13, %c1, %c0_8, %c0_9] : memref<7x4x6x64xbf16, #tpu.memory_space<vmem>>, vector<1x1x6x64xbf16>
    %15 = vector.shape_cast %14 : vector<1x1x6x64xbf16> to vector<6x64xbf16>
    %cst_10 = arith.constant dense<0.000000e+00> : vector<32x64xf32>
    %16 = tpu.matmul %12, %15, %cst_10 {dimension_numbers = #tpu.dot_dimension_numbers<[1], [0], [0], [1], [0, 0, 1, 1], [], []>} : vector<32x6xbf16>, vector<6x64xbf16>, vector<32x64xf32> -> vector<32x64xf32>
    %17 = arith.addf %11, %16 : vector<32x64xf32>
    %18 = vector.extract_strided_slice %4 {offsets = [2, 0], sizes = [32, 6], strides = [1, 1]} : vector<35x6xbf16> to vector<32x6xbf16>
    %19 = arith.index_cast %arg2 : i32 to index
    %c2 = arith.constant 2 : index
    %c0_11 = arith.constant 0 : index
    %c0_12 = arith.constant 0 : index
    %20 = vector.load %arg4[%19, %c2, %c0_11, %c0_12] : memref<7x4x6x64xbf16, #tpu.memory_space<vmem>>, vector<1x1x6x64xbf16>
    %21 = vector.shape_cast %20 : vector<1x1x6x64xbf16> to vector<6x64xbf16>
    %cst_13 = arith.constant dense<0.000000e+00> : vector<32x64xf32>
    %22 = tpu.matmul %18, %21, %cst_13 {dimension_numbers = #tpu.dot_dimension_numbers<[1], [0], [0], [1], [0, 0, 1, 1], [], []>} : vector<32x6xbf16>, vector<6x64xbf16>, vector<32x64xf32> -> vector<32x64xf32>
    %23 = arith.addf %17, %22 : vector<32x64xf32>
    %24 = vector.extract_strided_slice %4 {offsets = [3, 0], sizes = [32, 6], strides = [1, 1]} : vector<35x6xbf16> to vector<32x6xbf16>
    %25 = arith.index_cast %arg2 : i32 to index
    %c3 = arith.constant 3 : index
    %c0_14 = arith.constant 0 : index
    %c0_15 = arith.constant 0 : index
    %26 = vector.load %arg4[%25, %c3, %c0_14, %c0_15] : memref<7x4x6x64xbf16, #tpu.memory_space<vmem>>, vector<1x1x6x64xbf16>
    %27 = vector.shape_cast %26 : vector<1x1x6x64xbf16> to vector<6x64xbf16>
    %cst_16 = arith.constant dense<0.000000e+00> : vector<32x64xf32>
    %28 = tpu.matmul %24, %27, %cst_16 {dimension_numbers = #tpu.dot_dimension_numbers<[1], [0], [0], [1], [0, 0, 1, 1], [], []>} : vector<32x6xbf16>, vector<6x64xbf16>, vector<32x64xf32> -> vector<32x64xf32>
    %29 = arith.addf %23, %28 : vector<32x64xf32>
    %c0_17 = arith.constant 0 : index
    %c0_18 = arith.constant 0 : index
    %30 = vector.load %arg6[%c0_17, %c0_18] : memref<32x64xf32, #tpu.memory_space<vmem>>, vector<32x64xf32>
    %31 = arith.addf %30, %29 : vector<32x64xf32>
    %c0_19 = arith.constant 0 : index
    %c0_20 = arith.constant 0 : index
    %32 = vector.load %arg6[%c0_19, %c0_20] : memref<32x64xf32, #tpu.memory_space<vmem>>, vector<32x64xf32>
    tpu.vector_store %arg6[%c0_19, %c0_20], %31 {strides = array<i32>} : memref<32x64xf32, #tpu.memory_space<vmem>>, vector<32x64xf32>,
    %c6_i32 = arith.constant 6 : i32
    %33 = arith.cmpi eq, %arg2, %c6_i32 : i32
    %34 = arith.extui %33 : i1 to i32
    %c0_i32_21 = arith.constant 0 : i32
    %35 = arith.cmpi ne, %34, %c0_i32_21 : i32
    scf.if %35 {
      %c0_22 = arith.constant 0 : index
      %c0_23 = arith.constant 0 : index
      %36 = vector.load %arg6[%c0_22, %c0_23] : memref<32x64xf32, #tpu.memory_space<vmem>>, vector<32x64xf32>
      %cst_24 = arith.constant 0.000000e+00 : f32
      %37 = vector.broadcast %cst_24 : f32 to vector<32x64xf32>
      %38 = arith.maximumf %36, %37 : vector<32x64xf32>
      %39 = arith.truncf %38 : vector<32x64xf32> to vector<32x64xbf16>
      %c0_25 = arith.constant 0 : index
      %c0_26 = arith.constant 0 : index
      %c0_27 = arith.constant 0 : index
      %c0_28 = arith.constant 0 : index
      %40 = vector.load %arg5[%c0_25, %c0_26, %c0_27, %c0_28] : memref<1x1x32x64xbf16, #tpu.memory_space<vmem>>, vector<1x1x32x64xbf16>
      %41 = vector.shape_cast %40 : vector<1x1x32x64xbf16> to vector<32x64xbf16>
      %42 = vector.shape_cast %39 : vector<32x64xbf16> to vector<1x1x32x64xbf16>
      tpu.vector_store %arg5[%c0_25, %c0_26, %c0_27, %c0_28], %42 {strides = array<i32>} : memref<1x1x32x64xbf16, #tpu.memory_space<vmem>>, vector<1x1x32x64xbf16>,
    } else {
    }
    return
  }
  func.func @transform_0(%arg0: i32, %arg1: i32, %arg2: i32) -> (i32, i32, i32, i32) {
    %c2_i32 = arith.constant 2 : i32
    %0 = arith.muli %c2_i32, %arg1 : i32
    %1 = arith.addi %0, %arg2 : i32
    %c0_i32 = arith.constant 0 : i32
    %c0_i32_0 = arith.constant 0 : i32
    %c0_i32_1 = arith.constant 0 : i32
    return %arg0, %1, %c0_i32, %c0_i32_0 : i32, i32, i32, i32
  }
  func.func @transform_1(%arg0: i32, %arg1: i32, %arg2: i32) -> (i32, i32, i32, i32) {
    %c0_i32 = arith.constant 0 : i32
    %c0_i32_0 = arith.constant 0 : i32
    %c0_i32_1 = arith.constant 0 : i32
    %c0_i32_2 = arith.constant 0 : i32
    %c0_i32_3 = arith.constant 0 : i32
    return %c0_i32, %c0_i32_0, %c0_i32_1, %c0_i32_2 : i32, i32, i32, i32
  }
  func.func @transform_2(%arg0: i32, %arg1: i32, %arg2: i32) -> (i32, i32, i32, i32) {
    %c0_i32 = arith.constant 0 : i32
    %c0_i32_0 = arith.constant 0 : i32
    %c0_i32_1 = arith.constant 0 : i32
    return %arg0, %arg1, %c0_i32, %c0_i32_0 : i32, i32, i32, i32
  }
}

module attributes {stable_mosaic.version = 11 : i64} {
  func.func @_conv_rowtap_kernel(%arg0: i32, %arg1: i32, %arg2: i32, %arg3: memref<1x1x17x128xbf16, #tpu.memory_space<vmem>>, %arg4: memref<3x2x128x64xbf16, #tpu.memory_space<vmem>>, %arg5: memref<1x1x16x64xbf16, #tpu.memory_space<vmem>>, %arg6: memref<16x64xf32, #tpu.memory_space<vmem>>) attributes {dimension_semantics = [#tpu.dimension_semantics<parallel>, #tpu.dimension_semantics<parallel>, #tpu.dimension_semantics<arbitrary>], iteration_bounds = array<i64: 2, 16, 3>, scalar_prefetch = 0 : i64, scratch_operands = 1 : i64, tpu.core_type = #tpu.core_type<tc>, window_params = [{transform_indices = @transform_0, window_bounds = array<i64: 1, 1, 17, 128>}, {pipeline_mode = #tpu.pipeline_mode<synchronous>, transform_indices = @transform_1, window_bounds = array<i64: 3, 2, 128, 64>}, {transform_indices = @transform_2, window_bounds = array<i64: 1, 1, 16, 64>}]} {
    %c0_i32 = arith.constant 0 : i32
    %0 = arith.cmpi eq, %arg2, %c0_i32 : i32
    %1 = arith.extui %0 : i1 to i32
    %c0_i32_0 = arith.constant 0 : i32
    %2 = arith.cmpi ne, %1, %c0_i32_0 : i32
    scf.if %2 {
      %cst_16 = arith.constant 0.000000e+00 : f32
      %24 = vector.broadcast %cst_16 : f32 to vector<16x64xf32>
      %c0_17 = arith.constant 0 : index
      %c0_18 = arith.constant 0 : index
      %25 = vector.load %arg6[%c0_17, %c0_18] : memref<16x64xf32, #tpu.memory_space<vmem>>, vector<16x64xf32>
      tpu.vector_store %arg6[%c0_17, %c0_18], %24 {strides = array<i32>} : memref<16x64xf32, #tpu.memory_space<vmem>>, vector<16x64xf32>,
    } else {
    }
    %c0 = arith.constant 0 : index
    %c0_1 = arith.constant 0 : index
    %c0_2 = arith.constant 0 : index
    %c0_3 = arith.constant 0 : index
    %3 = vector.load %arg3[%c0, %c0_1, %c0_2, %c0_3] : memref<1x1x17x128xbf16, #tpu.memory_space<vmem>>, vector<1x1x17x128xbf16>
    %4 = vector.shape_cast %3 : vector<1x1x17x128xbf16> to vector<17x128xbf16>
    %cst = arith.constant 0.000000e+00 : f32
    %5 = vector.broadcast %cst : f32 to vector<16x64xf32>
    %6 = vector.extract_strided_slice %4 {offsets = [0, 0], sizes = [16, 128], strides = [1, 1]} : vector<17x128xbf16> to vector<16x128xbf16>
    %7 = arith.index_cast %arg2 : i32 to index
    %c0_4 = arith.constant 0 : index
    %c0_5 = arith.constant 0 : index
    %c0_6 = arith.constant 0 : index
    %8 = vector.load %arg4[%7, %c0_4, %c0_5, %c0_6] : memref<3x2x128x64xbf16, #tpu.memory_space<vmem>>, vector<1x1x128x64xbf16>
    %9 = vector.shape_cast %8 : vector<1x1x128x64xbf16> to vector<128x64xbf16>
    %cst_7 = arith.constant dense<0.000000e+00> : vector<16x64xf32>
    %10 = tpu.matmul %6, %9, %cst_7 {dimension_numbers = #tpu.dot_dimension_numbers<[1], [0], [0], [1], [0, 0, 1, 1], [], []>} : vector<16x128xbf16>, vector<128x64xbf16>, vector<16x64xf32> -> vector<16x64xf32>
    %11 = arith.addf %5, %10 : vector<16x64xf32>
    %12 = vector.extract_strided_slice %4 {offsets = [1, 0], sizes = [16, 128], strides = [1, 1]} : vector<17x128xbf16> to vector<16x128xbf16>
    %13 = arith.index_cast %arg2 : i32 to index
    %c1 = arith.constant 1 : index
    %c0_8 = arith.constant 0 : index
    %c0_9 = arith.constant 0 : index
    %14 = vector.load %arg4[%13, %c1, %c0_8, %c0_9] : memref<3x2x128x64xbf16, #tpu.memory_space<vmem>>, vector<1x1x128x64xbf16>
    %15 = vector.shape_cast %14 : vector<1x1x128x64xbf16> to vector<128x64xbf16>
    %cst_10 = arith.constant dense<0.000000e+00> : vector<16x64xf32>
    %16 = tpu.matmul %12, %15, %cst_10 {dimension_numbers = #tpu.dot_dimension_numbers<[1], [0], [0], [1], [0, 0, 1, 1], [], []>} : vector<16x128xbf16>, vector<128x64xbf16>, vector<16x64xf32> -> vector<16x64xf32>
    %17 = arith.addf %11, %16 : vector<16x64xf32>
    %c0_11 = arith.constant 0 : index
    %c0_12 = arith.constant 0 : index
    %18 = vector.load %arg6[%c0_11, %c0_12] : memref<16x64xf32, #tpu.memory_space<vmem>>, vector<16x64xf32>
    %19 = arith.addf %18, %17 : vector<16x64xf32>
    %c0_13 = arith.constant 0 : index
    %c0_14 = arith.constant 0 : index
    %20 = vector.load %arg6[%c0_13, %c0_14] : memref<16x64xf32, #tpu.memory_space<vmem>>, vector<16x64xf32>
    tpu.vector_store %arg6[%c0_13, %c0_14], %19 {strides = array<i32>} : memref<16x64xf32, #tpu.memory_space<vmem>>, vector<16x64xf32>,
    %c2_i32 = arith.constant 2 : i32
    %21 = arith.cmpi eq, %arg2, %c2_i32 : i32
    %22 = arith.extui %21 : i1 to i32
    %c0_i32_15 = arith.constant 0 : i32
    %23 = arith.cmpi ne, %22, %c0_i32_15 : i32
    scf.if %23 {
      %c0_16 = arith.constant 0 : index
      %c0_17 = arith.constant 0 : index
      %24 = vector.load %arg6[%c0_16, %c0_17] : memref<16x64xf32, #tpu.memory_space<vmem>>, vector<16x64xf32>
      %cst_18 = arith.constant 0.000000e+00 : f32
      %25 = vector.broadcast %cst_18 : f32 to vector<16x64xf32>
      %26 = arith.maximumf %24, %25 : vector<16x64xf32>
      %27 = arith.truncf %26 : vector<16x64xf32> to vector<16x64xbf16>
      %c0_19 = arith.constant 0 : index
      %c0_20 = arith.constant 0 : index
      %c0_21 = arith.constant 0 : index
      %c0_22 = arith.constant 0 : index
      %28 = vector.load %arg5[%c0_19, %c0_20, %c0_21, %c0_22] : memref<1x1x16x64xbf16, #tpu.memory_space<vmem>>, vector<1x1x16x64xbf16>
      %29 = vector.shape_cast %28 : vector<1x1x16x64xbf16> to vector<16x64xbf16>
      %30 = vector.shape_cast %27 : vector<16x64xbf16> to vector<1x1x16x64xbf16>
      tpu.vector_store %arg5[%c0_19, %c0_20, %c0_21, %c0_22], %30 {strides = array<i32>} : memref<1x1x16x64xbf16, #tpu.memory_space<vmem>>, vector<1x1x16x64xbf16>,
    } else {
    }
    return
  }
  func.func @transform_0(%arg0: i32, %arg1: i32, %arg2: i32) -> (i32, i32, i32, i32) {
    %c2_i32 = arith.constant 2 : i32
    %0 = arith.muli %c2_i32, %arg1 : i32
    %1 = arith.addi %0, %arg2 : i32
    %c0_i32 = arith.constant 0 : i32
    %c0_i32_0 = arith.constant 0 : i32
    %c0_i32_1 = arith.constant 0 : i32
    return %arg0, %1, %c0_i32, %c0_i32_0 : i32, i32, i32, i32
  }
  func.func @transform_1(%arg0: i32, %arg1: i32, %arg2: i32) -> (i32, i32, i32, i32) {
    %c0_i32 = arith.constant 0 : i32
    %c0_i32_0 = arith.constant 0 : i32
    %c0_i32_1 = arith.constant 0 : i32
    %c0_i32_2 = arith.constant 0 : i32
    %c0_i32_3 = arith.constant 0 : i32
    return %c0_i32, %c0_i32_0, %c0_i32_1, %c0_i32_2 : i32, i32, i32, i32
  }
  func.func @transform_2(%arg0: i32, %arg1: i32, %arg2: i32) -> (i32, i32, i32, i32) {
    %c0_i32 = arith.constant 0 : i32
    %c0_i32_0 = arith.constant 0 : i32
    %c0_i32_1 = arith.constant 0 : i32
    return %arg0, %arg1, %c0_i32, %c0_i32_0 : i32, i32, i32, i32
  }
}

module attributes {stable_mosaic.version = 11 : i64} {
  func.func @_conv_rowtap_kernel(%arg0: i32, %arg1: i32, %arg2: i32, %arg3: memref<1x1x9x128xbf16, #tpu.memory_space<vmem>>, %arg4: memref<3x2x128x64xbf16, #tpu.memory_space<vmem>>, %arg5: memref<1x1x8x64xbf16, #tpu.memory_space<vmem>>, %arg6: memref<8x64xf32, #tpu.memory_space<vmem>>) attributes {dimension_semantics = [#tpu.dimension_semantics<parallel>, #tpu.dimension_semantics<parallel>, #tpu.dimension_semantics<arbitrary>], iteration_bounds = array<i64: 2, 8, 3>, scalar_prefetch = 0 : i64, scratch_operands = 1 : i64, tpu.core_type = #tpu.core_type<tc>, window_params = [{transform_indices = @transform_0, window_bounds = array<i64: 1, 1, 9, 128>}, {pipeline_mode = #tpu.pipeline_mode<synchronous>, transform_indices = @transform_1, window_bounds = array<i64: 3, 2, 128, 64>}, {transform_indices = @transform_2, window_bounds = array<i64: 1, 1, 8, 64>}]} {
    %c0_i32 = arith.constant 0 : i32
    %0 = arith.cmpi eq, %arg2, %c0_i32 : i32
    %1 = arith.extui %0 : i1 to i32
    %c0_i32_0 = arith.constant 0 : i32
    %2 = arith.cmpi ne, %1, %c0_i32_0 : i32
    scf.if %2 {
      %cst_16 = arith.constant 0.000000e+00 : f32
      %24 = vector.broadcast %cst_16 : f32 to vector<8x64xf32>
      %c0_17 = arith.constant 0 : index
      %c0_18 = arith.constant 0 : index
      %25 = vector.load %arg6[%c0_17, %c0_18] : memref<8x64xf32, #tpu.memory_space<vmem>>, vector<8x64xf32>
      tpu.vector_store %arg6[%c0_17, %c0_18], %24 {strides = array<i32>} : memref<8x64xf32, #tpu.memory_space<vmem>>, vector<8x64xf32>,
    } else {
    }
    %c0 = arith.constant 0 : index
    %c0_1 = arith.constant 0 : index
    %c0_2 = arith.constant 0 : index
    %c0_3 = arith.constant 0 : index
    %3 = vector.load %arg3[%c0, %c0_1, %c0_2, %c0_3] : memref<1x1x9x128xbf16, #tpu.memory_space<vmem>>, vector<1x1x9x128xbf16>
    %4 = vector.shape_cast %3 : vector<1x1x9x128xbf16> to vector<9x128xbf16>
    %cst = arith.constant 0.000000e+00 : f32
    %5 = vector.broadcast %cst : f32 to vector<8x64xf32>
    %6 = vector.extract_strided_slice %4 {offsets = [0, 0], sizes = [8, 128], strides = [1, 1]} : vector<9x128xbf16> to vector<8x128xbf16>
    %7 = arith.index_cast %arg2 : i32 to index
    %c0_4 = arith.constant 0 : index
    %c0_5 = arith.constant 0 : index
    %c0_6 = arith.constant 0 : index
    %8 = vector.load %arg4[%7, %c0_4, %c0_5, %c0_6] : memref<3x2x128x64xbf16, #tpu.memory_space<vmem>>, vector<1x1x128x64xbf16>
    %9 = vector.shape_cast %8 : vector<1x1x128x64xbf16> to vector<128x64xbf16>
    %cst_7 = arith.constant dense<0.000000e+00> : vector<8x64xf32>
    %10 = tpu.matmul %6, %9, %cst_7 {dimension_numbers = #tpu.dot_dimension_numbers<[1], [0], [0], [1], [0, 0, 1, 1], [], []>} : vector<8x128xbf16>, vector<128x64xbf16>, vector<8x64xf32> -> vector<8x64xf32>
    %11 = arith.addf %5, %10 : vector<8x64xf32>
    %12 = vector.extract_strided_slice %4 {offsets = [1, 0], sizes = [8, 128], strides = [1, 1]} : vector<9x128xbf16> to vector<8x128xbf16>
    %13 = arith.index_cast %arg2 : i32 to index
    %c1 = arith.constant 1 : index
    %c0_8 = arith.constant 0 : index
    %c0_9 = arith.constant 0 : index
    %14 = vector.load %arg4[%13, %c1, %c0_8, %c0_9] : memref<3x2x128x64xbf16, #tpu.memory_space<vmem>>, vector<1x1x128x64xbf16>
    %15 = vector.shape_cast %14 : vector<1x1x128x64xbf16> to vector<128x64xbf16>
    %cst_10 = arith.constant dense<0.000000e+00> : vector<8x64xf32>
    %16 = tpu.matmul %12, %15, %cst_10 {dimension_numbers = #tpu.dot_dimension_numbers<[1], [0], [0], [1], [0, 0, 1, 1], [], []>} : vector<8x128xbf16>, vector<128x64xbf16>, vector<8x64xf32> -> vector<8x64xf32>
    %17 = arith.addf %11, %16 : vector<8x64xf32>
    %c0_11 = arith.constant 0 : index
    %c0_12 = arith.constant 0 : index
    %18 = vector.load %arg6[%c0_11, %c0_12] : memref<8x64xf32, #tpu.memory_space<vmem>>, vector<8x64xf32>
    %19 = arith.addf %18, %17 : vector<8x64xf32>
    %c0_13 = arith.constant 0 : index
    %c0_14 = arith.constant 0 : index
    %20 = vector.load %arg6[%c0_13, %c0_14] : memref<8x64xf32, #tpu.memory_space<vmem>>, vector<8x64xf32>
    tpu.vector_store %arg6[%c0_13, %c0_14], %19 {strides = array<i32>} : memref<8x64xf32, #tpu.memory_space<vmem>>, vector<8x64xf32>,
    %c2_i32 = arith.constant 2 : i32
    %21 = arith.cmpi eq, %arg2, %c2_i32 : i32
    %22 = arith.extui %21 : i1 to i32
    %c0_i32_15 = arith.constant 0 : i32
    %23 = arith.cmpi ne, %22, %c0_i32_15 : i32
    scf.if %23 {
      %c0_16 = arith.constant 0 : index
      %c0_17 = arith.constant 0 : index
      %24 = vector.load %arg6[%c0_16, %c0_17] : memref<8x64xf32, #tpu.memory_space<vmem>>, vector<8x64xf32>
      %cst_18 = arith.constant 0.000000e+00 : f32
      %25 = vector.broadcast %cst_18 : f32 to vector<8x64xf32>
      %26 = arith.maximumf %24, %25 : vector<8x64xf32>
      %27 = arith.truncf %26 : vector<8x64xf32> to vector<8x64xbf16>
      %c0_19 = arith.constant 0 : index
      %c0_20 = arith.constant 0 : index
      %c0_21 = arith.constant 0 : index
      %c0_22 = arith.constant 0 : index
      %28 = vector.load %arg5[%c0_19, %c0_20, %c0_21, %c0_22] : memref<1x1x8x64xbf16, #tpu.memory_space<vmem>>, vector<1x1x8x64xbf16>
      %29 = vector.shape_cast %28 : vector<1x1x8x64xbf16> to vector<8x64xbf16>
      %30 = vector.shape_cast %27 : vector<8x64xbf16> to vector<1x1x8x64xbf16>
      tpu.vector_store %arg5[%c0_19, %c0_20, %c0_21, %c0_22], %30 {strides = array<i32>} : memref<1x1x8x64xbf16, #tpu.memory_space<vmem>>, vector<1x1x8x64xbf16>,
    } else {
    }
    return
  }
  func.func @transform_0(%arg0: i32, %arg1: i32, %arg2: i32) -> (i32, i32, i32, i32) {
    %c2_i32 = arith.constant 2 : i32
    %0 = arith.muli %c2_i32, %arg1 : i32
    %1 = arith.addi %0, %arg2 : i32
    %c0_i32 = arith.constant 0 : i32
    %c0_i32_0 = arith.constant 0 : i32
    %c0_i32_1 = arith.constant 0 : i32
    return %arg0, %1, %c0_i32, %c0_i32_0 : i32, i32, i32, i32
  }
  func.func @transform_1(%arg0: i32, %arg1: i32, %arg2: i32) -> (i32, i32, i32, i32) {
    %c0_i32 = arith.constant 0 : i32
    %c0_i32_0 = arith.constant 0 : i32
    %c0_i32_1 = arith.constant 0 : i32
    %c0_i32_2 = arith.constant 0 : i32
    %c0_i32_3 = arith.constant 0 : i32
    return %c0_i32, %c0_i32_0, %c0_i32_1, %c0_i32_2 : i32, i32, i32, i32
  }
  func.func @transform_2(%arg0: i32, %arg1: i32, %arg2: i32) -> (i32, i32, i32, i32) {
    %c0_i32 = arith.constant 0 : i32
    %c0_i32_0 = arith.constant 0 : i32
    %c0_i32_1 = arith.constant 0 : i32
    return %arg0, %arg1, %c0_i32, %c0_i32_0 : i32, i32, i32, i32
  }
}

module attributes {stable_mosaic.version = 11 : i64} {
  func.func @_matmul_relu_kernel(%arg0: i32, %arg1: memref<128x64xbf16, #tpu.memory_space<vmem>>, %arg2: memref<64x128xbf16, #tpu.memory_space<vmem>>, %arg3: memref<128x128xf32, #tpu.memory_space<vmem>>) attributes {dimension_semantics = [#tpu.dimension_semantics<parallel>], iteration_bounds = array<i64: 1>, scalar_prefetch = 0 : i64, scratch_operands = 0 : i64, tpu.core_type = #tpu.core_type<tc>, window_params = [{transform_indices = @transform_0, window_bounds = array<i64: 128, 64>}, {pipeline_mode = #tpu.pipeline_mode<synchronous>, transform_indices = @transform_1, window_bounds = array<i64: 64, 128>}, {transform_indices = @transform_2, window_bounds = array<i64: 128, 128>}]} {
    %c0 = arith.constant 0 : index
    %c0_0 = arith.constant 0 : index
    %0 = vector.load %arg1[%c0, %c0_0] : memref<128x64xbf16, #tpu.memory_space<vmem>>, vector<128x64xbf16>
    %c0_1 = arith.constant 0 : index
    %c0_2 = arith.constant 0 : index
    %1 = vector.load %arg2[%c0_1, %c0_2] : memref<64x128xbf16, #tpu.memory_space<vmem>>, vector<64x128xbf16>
    %cst = arith.constant dense<0.000000e+00> : vector<128x128xf32>
    %2 = tpu.matmul %0, %1, %cst {dimension_numbers = #tpu.dot_dimension_numbers<[1], [0], [0], [1], [0, 0, 1, 1], [], []>} : vector<128x64xbf16>, vector<64x128xbf16>, vector<128x128xf32> -> vector<128x128xf32>
    %cst_3 = arith.constant 0.000000e+00 : f32
    %3 = vector.broadcast %cst_3 : f32 to vector<128x128xf32>
    %4 = arith.maximumf %2, %3 : vector<128x128xf32>
    %c0_4 = arith.constant 0 : index
    %c0_5 = arith.constant 0 : index
    %5 = vector.load %arg3[%c0_4, %c0_5] : memref<128x128xf32, #tpu.memory_space<vmem>>, vector<128x128xf32>
    tpu.vector_store %arg3[%c0_4, %c0_5], %4 {strides = array<i32>} : memref<128x128xf32, #tpu.memory_space<vmem>>, vector<128x128xf32>,
    return
  }
  func.func @transform_0(%arg0: i32) -> (i32, i32) {
    %c0_i32 = arith.constant 0 : i32
    %c0_i32_0 = arith.constant 0 : i32
    return %arg0, %c0_i32 : i32, i32
  }
  func.func @transform_1(%arg0: i32) -> (i32, i32) {
    %c0_i32 = arith.constant 0 : i32
    %c0_i32_0 = arith.constant 0 : i32
    %c0_i32_1 = arith.constant 0 : i32
    return %c0_i32, %c0_i32_0 : i32, i32
  }
  func.func @transform_2(%arg0: i32) -> (i32, i32) {
    %c0_i32 = arith.constant 0 : i32
    %c0_i32_0 = arith.constant 0 : i32
    return %arg0, %c0_i32 : i32, i32
  }
}

</mosaic_0001>

<llo_original>
// kernel: spatial_path_forward.4
$region0: #{spatial_path_forward.4}
  #allocation0 [shape = 'u32[]', space=smem, size = 0x4, offset = 0x4, fixed_abs, tag = 'smem constant byte address 0x4 - core index']
  #allocation1 [shape = 'u32[72,128]{1,0:T(1,128)}', space=vmem, size = 0x9000, scoped, tag = 'internal scratch']
  #allocation2 [shape = 'f32[32,64]{1,0:T(8,128)}', space=vmem, size = 0x4000, scoped, tag = 'scratch operand']
  %s0 = inlined_call_operand.vmem [shape: bf16[2,70,35,6], index: 0, kind: input, shape index: {}]
  %s1 = inlined_call_operand.vmem [shape: bf16[7,4,6,64], index: 1, kind: input, shape index: {}]
  %s2 = inlined_call_operand.vmem [shape: bf16[2,32,32,64], index: 2, kind: output, shape index: {}]
  %s3 = sld [smem:[#allocation0]]
  $region49: #{spatial_path_forward.4} parent=0
    _
  %s5 = ssub.s32 1, %s3
  %s6 = scalar_select 0, %s5, %s3
  loop: start=0, step=1, limit=450
  $region2: #{spatial_path_forward.4} parent=0 // loop_pre_header
    _
  $region3: #{spatial_path_forward.4} parent=0 // loop_header
    %s8 = sphi 0, %s12
    %p9 = scmp.ge.s32.totalorder %s8, 450
    %s15 = sphi 0, %s34
    %s16 = sphi 0, %s30
    %s17 = sphi 0, %s26
    %s18 = sphi 0, %s15
    %s19 = sphi 0, %s16
    %s20 = sphi 0, %s17
    %s21 = sphi 0, %s18
    %s22 = sphi 0, %s19
    %s23 = sphi 0, %s20
    %s43 = sphi 0, %s45
    %s46 = sphi 0, %s43
    %s47 = sphi 0, %s46
    %s63 = sphi 0, %s47
    %s67 = sphi 0, %s67
    %s69 = sphi 0, %s67
    %s70 = sphi 0, %s69
    %s84 = sphi 0, %s70
    %s92 = sphi 0, %s94
    %s95 = sphi 0, %s92
    %s96 = sphi 0, %s95
    %s112 = sphi 0, %s96
  $region4: #{spatial_path_forward.4} parent=0 // loop_header_branch
    %11 = sbr.rel (%p9) target = $region8
  $region5: #{spatial_path_forward.4} parent=0 // loop_body
    %s13 = ssub.s32 %s8, 1
    %s14 = ssub.s32 %s8, 2
    %s24 = sadd.s32 1, %s17
    %p25 = scmp.ge.s32.totalorder %s24, 7
    %s26 = scalar_select %p25, 0, %s24
    %s27 = sadd.s32 1, %s16
    %s28 = scalar_select %p25, %s27, %s16
    %p29 = scmp.ge.s32.totalorder %s28, 32
    %s30 = scalar_select %p29, 0, %s28
    %s31 = sadd.s32 1, %s15
    %s32 = scalar_select %p29, %s31, %s15
    %p33 = scmp.ge.s32.totalorder %s32, 2
    %s34 = scalar_select %p33, 0, %s32
    %s35 = smul.u32 %s16, 2
    %s36 = sadd.s32 %s35, %s17
    %s37 = smul.u32 %s30, 2
    %s38 = sadd.s32 %s37, %s26
    %s39 = ssub.s32 %s15, %s34
    %s40 = ssub.s32 %s36, %s38
    %s41 = sor.u32 %s39, %s40
    %p42 = scmp.eq.s32.totalorder %s41, 0
    %s44 = sadd.s32 %s43, 1
    %s45 = scalar_select %p42, %s43, %s44
    %p48 = pneg %p42
    %p49 = scmp.eq.s32.totalorder %s8, 447
    %p50 = por %p48, %p49
    %p51 = scmp.ne.s32.totalorder %s43, %s46
    %p52 = scmp.eq.s32.totalorder %s8, 0
    %p53 = por %p51, %p52
    %p54 = scmp.ne.s32.totalorder %s43, %s46
    %p55 = scmp.eq.s32.totalorder %s13, 447
    %p56 = por %p54, %p55
    %p57 = scmp.ne.s32.totalorder %s46, %s47
    %p58 = scmp.eq.s32.totalorder %s13, 0
    %p59 = por %p57, %p58
    %p60 = scmp.ne.s32.totalorder %s46, %s47
    %p61 = scmp.eq.s32.totalorder %s14, 447
    %p62 = por %p60, %p61
    %p64 = scmp.ne.s32.totalorder %s47, %s63
    %p65 = scmp.eq.s32.totalorder %s14, 0
    %p66 = por %p64, %p65
    %s68 = sadd.s32 %s67, 1
    %p71 = scmp.eq.s32.totalorder %s8, 447
    %p72 = scmp.ne.s32.totalorder %s67, %s69
    %p73 = scmp.eq.s32.totalorder %s8, 0
    %p74 = por %p72, %p73
    %p75 = scmp.ne.s32.totalorder %s67, %s69
    %p76 = scmp.eq.s32.totalorder %s13, 447
    %p77 = por %p75, %p76
    %p78 = scmp.ne.s32.totalorder %s69, %s70
    %p79 = scmp.eq.s32.totalorder %s13, 0
    %p80 = por %p78, %p79
    %p81 = scmp.ne.s32.totalorder %s69, %s70
    %p82 = scmp.eq.s32.totalorder %s14, 447
    %p83 = por %p81, %p82
    %p85 = scmp.ne.s32.totalorder %s70, %s84
    %p86 = scmp.eq.s32.totalorder %s14, 0
    %p87 = por %p85, %p86
    %s88 = ssub.s32 %s15, %s34
    %s89 = ssub.s32 %s16, %s30
    %s90 = sor.u32 %s88, %s89
    %p91 = scmp.eq.s32.totalorder %s90, 0
    %s93 = sadd.s32 %s92, 1
    %s94 = scalar_select %p91, %s92, %s93
    %p97 = pneg %p91
    %p98 = scmp.eq.s32.totalorder %s8, 447
    %p99 = por %p97, %p98
    %p100 = scmp.ne.s32.totalorder %s92, %s95
    %p101 = scmp.eq.s32.totalorder %s8, 0
    %p102 = por %p100, %p101
    %p103 = scmp.ne.s32.totalorder %s92, %s95
    %p104 = scmp.eq.s32.totalorder %s13, 447
    %p105 = por %p103, %p104
    %p106 = scmp.ne.s32.totalorder %s95, %s96
    %p107 = scmp.eq.s32.totalorder %s13, 0
    %p108 = por %p106, %p107
    %p109 = scmp.ne.s32.totalorder %s95, %s96
    %p110 = scmp.eq.s32.totalorder %s14, 447
    %p111 = por %p109, %p110
    %p113 = scmp.ne.s32.totalorder %s96, %s112
    %p114 = scmp.eq.s32.totalorder %s14, 0
    %p115 = por %p113, %p114
    %p116 = scmp.le.s32.totalorder 1, %s8
    %p117 = scmp.lt.s32.totalorder %s8, 449
    %p118 = pnand %p116, %p117
    %p119 = pneg %p118
    // Predicated region
    $region9: #{spatial_path_forward.4} parent=5 // pred_check
      _
    $region10: #{spatial_path_forward.4} parent=5 // pred_check_branch
      %121 = sbr.rel (%p118) target = $region12
    $region11: #{spatial_path_forward.4} parent=5 // pred_region
      %s122 = ssub.s32 %s8, 1
      // Predicated region
      $region13: #{spatial_path_forward.4} parent=11 // pred_check
        %p123 = pneg %p80
      $region14: #{spatial_path_forward.4} parent=11 // pred_check_branch
        %125 = sbr.rel (%p123) target = $region16
      $region15: #{spatial_path_forward.4} parent=11 // pred_region
        _
      $region16: #{spatial_path_forward.4} parent=11 // pred_fallthru
        _
    $region12: #{spatial_path_forward.4} parent=5 // pred_fallthru
      _
    %p126 = scmp.lt.s32.totalorder %s8, 448
    // Predicated region
    $region17: #{spatial_path_forward.4} parent=5 // pred_check
      %p127 = pneg %p126
    $region18: #{spatial_path_forward.4} parent=5 // pred_check_branch
      %129 = sbr.rel (%p127) target = $region20
    $region19: #{spatial_path_forward.4} parent=5 // pred_region
      // Predicated region
      $region21: #{spatial_path_forward.4} parent=19 // pred_check
        %p130 = pneg %p53
      $region22: #{spatial_path_forward.4} parent=19 // pred_check_branch
        %132 = sbr.rel (%p130) target = $region24
      $region23: #{spatial_path_forward.4} parent=19 // pred_region
        %s133 = smul.u32 %s16, 2
        %s134 = sadd.s32 %s133, %s17
        %p135 = scmp.lt.s32.totalorder %s15, 1
        %s136 = scalar_select %p135, %s15, 1
        %p137 = scmp.lt.s32.totalorder %s134, 69
        %s138 = scalar_select %p137, %s134, 69
        %s139 = smul.addr %s138, 5
        %s140 = smul.addr %s136, 350
        %s141 = sadd.s32 %s139, %s140
        %s142 = smul.addr %s141, 4
        %s143 = scalar_lea.vmem %s0, %s142
        %s144 = smul.u32 %s16, 2
        %s145 = sadd.s32 %s144, %s17
      $region24: #{spatial_path_forward.4} parent=19 // pred_fallthru
        _
    $region20: #{spatial_path_forward.4} parent=5 // pred_fallthru
      _
    %p146 = scmp.le.s32.totalorder 1, %s8
    %p147 = scmp.lt.s32.totalorder %s8, 449
    %p148 = pnand %p146, %p147
    %p149 = pneg %p148
    // Predicated region
    $region25: #{spatial_path_forward.4} parent=5 // pred_check
      _
    $region26: #{spatial_path_forward.4} parent=5 // pred_check_branch
      %151 = sbr.rel (%p148) target = $region28
    $region27: #{spatial_path_forward.4} parent=5 // pred_region
      %s152 = ssub.s32 %s8, 1
      %s153 = smul.u32 %s19, 2
      %s154 = sadd.s32 %s153, %s20
      %p155 = scmp.lt.s32.totalorder %s18, 1
      %s156 = scalar_select %p155, %s18, 1
      %p157 = scmp.lt.s32.totalorder %s154, 69
      %s158 = scalar_select %p157, %s154, 69
      %s159 = smul.addr %s158, 5
      %s160 = smul.addr %s156, 350
      %s161 = sadd.s32 %s159, %s160
      %s162 = smul.addr %s161, 4
      %s163 = scalar_lea.vmem %s0, %s162
      %p164 = pneg %p59
      %p165 = pneg %p56
      %p166 = pneg %p80
      %p167 = pneg %p77
      %p168 = pneg %p108
      %p169 = pneg %p105
      %p170 = scmp.lt.s32.totalorder %s18, 1
      %s171 = scalar_select %p170, %s18, 1
      %p172 = scmp.lt.s32.totalorder %s19, 31
      %s173 = scalar_select %p172, %s19, 31
      %s174 = smul.addr %s173, 4
      %s175 = smul.addr %s171, 128
      %s176 = sadd.s32 %s174, %s175
      %s177 = smul.addr %s176, 4
      %s178 = scalar_lea.vmem %s2, %s177
      %s179 = smul.u32 %s19, 2
      %s180 = sadd.s32 %s179, %s20
      %p181 = scmp.lt.s32.totalorder %s18, 1
      %s182 = scalar_select %p181, %s18, 1
      %p183 = scmp.lt.s32.totalorder %s180, 69
      %s184 = scalar_select %p183, %s180, 69
      %s185 = smul.addr %s184, 5
      %s186 = smul.addr %s182, 350
      %s187 = sadd.s32 %s185, %s186
      %s188 = smul.addr %s187, 4
      %s189 = scalar_lea.vmem %s0, %s188
      %s190 = smul.u32 %s19, 2
      %s191 = sadd.s32 %s190, %s20
      %p192 = scmp.lt.s32.totalorder %s18, 1
      %s193 = scalar_select %p192, %s18, 1
      %p194 = scmp.lt.s32.totalorder %s19, 31
      %s195 = scalar_select %p194, %s19, 31
      %s196 = smul.addr %s195, 4
      %s197 = smul.addr %s193, 128
      %s198 = sadd.s32 %s196, %s197
      %s199 = smul.addr %s198, 4
      %s200 = scalar_lea.vmem %s2, %s199
      %p202 = scmp.eq.s32.totalorder %s20, 0
      // Predicated region
      $region29: #{spatial_path_forward.4} parent=27 // pred_check
        %p203 = pneg %p202
      $region30: #{spatial_path_forward.4} parent=27 // pred_check_branch
        %205 = sbr.rel (%p203) target = $region32
      $region31: #{spatial_path_forward.4} parent=27 // pred_region
        %vm206 = vcmask 523264
        %207 = vst.msk [vmem:[#allocation2] sm:$0xff] %vm206, 0.0
        %208 = vst.msk [vmem:[#allocation2 + $0x8] sm:$0xff] %vm206, 0.0
        %209 = vst.msk [vmem:[#allocation2 + $0x10] sm:$0xff] %vm206, 0.0
        %210 = vst.msk [vmem:[#allocation2 + $0x18] sm:$0xff] %vm206, 0.0
      $region32: #{spatial_path_forward.4} parent=27 // pred_fallthru
        _
      %v211 = vld [vmem:[%s189] sm:$0xf]
      %v212 = vld [vmem:[%s189 + $0x4] sm:$0xf]
      %v213 = vld [vmem:[%s189 + $0x8] sm:$0xf]
      %v214 = vld [vmem:[%s189 + $0xc] sm:$0xf]
      %v215 = vld [vmem:[%s189 + $0x10] sm:$0x3]
      %s216 = smul.u32 %s20, 4
      %s217 = smul.addr %s216, 4
      %s218 = scalar_lea.vmem %s1, %s217
      %v219 = vld [vmem:[%s218] sm:$0x7]
      %s220 = sadd.s32 1, %s216
      %s221 = smul.addr %s220, 4
      %s222 = scalar_lea.vmem %s1, %s221
      %v223 = vld [vmem:[%s222] sm:$0x7]
      %v229 = vunpack.c.l.b16 %v211
      %v230 = vunpack.c.l.b16 %v212
      %v231 = vunpack.c.l.b16 %v213
      %v232 = vunpack.c.l.b16 %v214
      %v233 = vunpack.c.l.b16 %v215
      %v234 = vpack.c.b16 %v230, %v229
      %v235 = vpack.c.b16 %v232, %v231
      %v236 = vpack.c.b16 %v233, %v233
      %vm237 = vsmask.f32 7424
      %v239 = vshrl.u32 %v234, 16
      %v241 = vshll.u32 %v234, 16
      %v243 = vrot.slane %v241, 1
      %v244 = vor.u32 %v239, %v243
      %v246 = vshll.u32 %v235, 16
      %v248 = vrot.slane %v246, 1
      %v249 = vsel %vm237, %v244, %v248
      %v250 = vshrl.u32 %v235, 16
      %v252 = vor.u32 %v250, %v248
      %v254 = vshll.u32 %v236, 16
      %v256 = vrot.slane %v254, 1
      %v257 = vsel %vm237, %v252, %v256
      %vm258 = vcmask 48128
      %v260 = vsel %vm258, %v249, 0
      %v263 = vsel %vm258, %v257, 0
      %vm265 = vcmask 1042432
      %v267 = vsel %vm265, %v223, 0
      %269 = vmatpush.bf16.msra.mxu0 0
      %270 = vmatpush.bf16.msra.mxu0 0
      %271 = vmatpush.bf16.msra.mxu0 0
      %272 = vmatpush.bf16.msra.mxu0 0
      %273 = vmatpush.bf16.msra.mxu0 0
      %274 = vmatpush.bf16.msra.mxu0 0
      %275 = vmatpush.bf16.msra.mxu0 0
      %276 = vmatpush.bf16.msra.mxu0 %v267
      %277 = vmatmul.bf16.gmra.mxu0 %v260
      %v278 = vpop.f32.mrf.mxu0
      %v279 = vadd.f32 0.0, %v278
      %v280 = vpop.f32.mrf.mxu0
      %v281 = vadd.f32 0.0, %v280
      %282 = vmatmul.bf16.gmra.mxu0 %v263
      %v283 = vpop.f32.mrf.mxu0
      %v284 = vadd.f32 0.0, %v283
      %v285 = vpop.f32.mrf.mxu0
      %v286 = vadd.f32 0.0, %v285
      %287 = vdwg.mxu0
      %v288 = vsel %vm258, %v234, 0
      %v290 = vsel %vm258, %v235, 0
      %v293 = vsel %vm265, %v219, 0
      %295 = vmatpush.bf16.msra.mxu0 0
      %296 = vmatpush.bf16.msra.mxu0 0
      %297 = vmatpush.bf16.msra.mxu0 0
      %298 = vmatpush.bf16.msra.mxu0 0
      %299 = vmatpush.bf16.msra.mxu0 0
      %300 = vmatpush.bf16.msra.mxu0 0
      %301 = vmatpush.bf16.msra.mxu0 0
      %302 = vmatpush.bf16.msra.mxu0 %v293
      %303 = vmatmul.bf16.gmra.mxu0 %v288
      %v304 = vpop.f32.mrf.mxu0
      %v305 = vadd.f32 %v279, %v304
      %v306 = vpop.f32.mrf.mxu0
      %v307 = vadd.f32 %v281, %v306
      %308 = vmatmul.bf16.gmra.mxu0 %v290
      %v309 = vpop.f32.mrf.mxu0
      %v310 = vadd.f32 %v284, %v309
      %v311 = vpop.f32.mrf.mxu0
      %v312 = vadd.f32 %v286, %v311
      %313 = vdwg.mxu0
      %s314 = sadd.s32 2, %s216
      %s315 = smul.addr %s314, 4
      %s316 = scalar_lea.vmem %s1, %s315
      %v317 = vld [vmem:[%s316] sm:$0x7]
      %vm318 = vcmask 1046528
      %v319 = vrot.slane %v234, 1
      %v320 = vrot.slane %v235, 1
      %v321 = vsel %vm318, %v319, %v320
      %v322 = vrot.slane %v236, 1
      %v323 = vsel %vm318, %v320, %v322
      %v325 = vsel %vm258, %v321, 0
      %v328 = vsel %vm258, %v323, 0
      %v331 = vsel %vm265, %v317, 0
      %333 = vmatpush.bf16.msra.mxu0 0
      %334 = vmatpush.bf16.msra.mxu0 0
      %335 = vmatpush.bf16.msra.mxu0 0
      %336 = vmatpush.bf16.msra.mxu0 0
      %337 = vmatpush.bf16.msra.mxu0 0
      %338 = vmatpush.bf16.msra.mxu0 0
      %339 = vmatpush.bf16.msra.mxu0 0
      %340 = vmatpush.bf16.msra.mxu0 %v331
      %341 = vmatmul.bf16.gmra.mxu0 %v325
      %v342 = vpop.f32.mrf.mxu0
      %v343 = vadd.f32 0.0, %v342
      %v344 = vpop.f32.mrf.mxu0
      %v345 = vadd.f32 0.0, %v344
      %346 = vmatmul.bf16.gmra.mxu0 %v328
      %v347 = vpop.f32.mrf.mxu0
      %v348 = vadd.f32 0.0, %v347
      %v349 = vpop.f32.mrf.mxu0
      %v350 = vadd.f32 0.0, %v349
      %351 = vdwg.mxu0
      %v352 = vadd.f32 %v305, %v343
      %v353 = vadd.f32 %v307, %v345
      %v354 = vadd.f32 %v310, %v348
      %v355 = vadd.f32 %v312, %v350
      %s356 = sadd.s32 3, %s216
      %s357 = smul.addr %s356, 4
      %s358 = scalar_lea.vmem %s1, %s357
      %v359 = vld [vmem:[%s358] sm:$0x7]
      %vm360 = vsmask.f32 6400
      %v361 = vrot.slane %v239, 1
      %v362 = vrot.slane %v241, 2
      %v363 = vor.u32 %v361, %v362
      %v364 = vrot.slane %v250, 1
      %v365 = vrot.slane %v246, 2
      %v366 = vor.u32 %v364, %v365
      %v367 = vsel %vm360, %v363, %v366
      %v368 = vshrl.u32 %v236, 16
      %v370 = vrot.slane %v368, 1
      %v371 = vrot.slane %v254, 2
      %v372 = vor.u32 %v370, %v371
      %v373 = vsel %vm360, %v366, %v372
      %v375 = vsel %vm258, %v367, 0
      %v378 = vsel %vm258, %v373, 0
      %v381 = vsel %vm265, %v359, 0
      %383 = vmatpush.bf16.msra.mxu0 0
      %384 = vmatpush.bf16.msra.mxu0 0
      %385 = vmatpush.bf16.msra.mxu0 0
      %386 = vmatpush.bf16.msra.mxu0 0
      %387 = vmatpush.bf16.msra.mxu0 0
      %388 = vmatpush.bf16.msra.mxu0 0
      %389 = vmatpush.bf16.msra.mxu0 0
      %390 = vmatpush.bf16.msra.mxu0 %v381
      %391 = vmatmul.bf16.gmra.mxu0 %v375
      %v392 = vpop.f32.mrf.mxu0
      %v393 = vadd.f32 0.0, %v392
      %v394 = vpop.f32.mrf.mxu0
      %v395 = vadd.f32 0.0, %v394
      %396 = vmatmul.bf16.gmra.mxu0 %v378
      %v397 = vpop.f32.mrf.mxu0
      %v398 = vadd.f32 0.0, %v397
      %v399 = vpop.f32.mrf.mxu0
      %v400 = vadd.f32 0.0, %v399
      %401 = vdwg.mxu0
      %v402 = vadd.f32 %v352, %v393
      %v403 = vadd.f32 %v353, %v395
      %v404 = vadd.f32 %v354, %v398
      %v405 = vadd.f32 %v355, %v400
      %v406 = vld [vmem:[#allocation2] sm:$0xff]
      %v407 = vld [vmem:[#allocation2 + $0x8] sm:$0xff]
      %v408 = vld [vmem:[#allocation2 + $0x10] sm:$0xff]
      %v409 = vld [vmem:[#allocation2 + $0x18] sm:$0xff]
      %v410 = vadd.f32 %v406, %v402
      %v411 = vadd.f32 %v407, %v403
      %v412 = vadd.f32 %v408, %v404
      %v413 = vadd.f32 %v409, %v405
      %vm414 = vcmask 523264
      %415 = vst.msk [vmem:[#allocation2] sm:$0xff] %vm414, %v410
      %416 = vst.msk [vmem:[#allocation2 + $0x8] sm:$0xff] %vm414, %v411
      %417 = vst.msk [vmem:[#allocation2 + $0x10] sm:$0xff] %vm414, %v412
      %418 = vst.msk [vmem:[#allocation2 + $0x18] sm:$0xff] %vm414, %v413
      %p419 = scmp.eq.s32.totalorder %s20, 6
      // Predicated region
      $region33: #{spatial_path_forward.4} parent=27 // pred_check
        %p420 = pneg %p419
      $region34: #{spatial_path_forward.4} parent=27 // pred_check_branch
        %422 = sbr.rel (%p420) target = $region36
      $region35: #{spatial_path_forward.4} parent=27 // pred_region
        %v423 = vld [vmem:[#allocation2] sm:$0xff]
        %v424 = vld [vmem:[#allocation2 + $0x8] sm:$0xff]
        %v425 = vld [vmem:[#allocation2 + $0x10] sm:$0xff]
        %v426 = vld [vmem:[#allocation2 + $0x18] sm:$0xff]
        %v427 = vmax.f32 %v423, 0.0
        %v428 = vmax.f32 %v424, 0.0
        %v429 = vmax.f32 %v425, 0.0
        %v430 = vmax.f32 %v426, 0.0
        %v431 = vpack.c.bf16 %v427, %v427
        %v432 = vpack.c.bf16 %v428, %v428
        %v433 = vpack.c.bf16 %v429, %v429
        %v434 = vpack.c.bf16 %v430, %v430
        %vm435 = vcmask 519168
        %436 = vst.msk [vmem:[%s200] sm:$0xf] %vm435, %v431
        %437 = vst.msk [vmem:[%s200 + $0x4] sm:$0xf] %vm435, %v432
        %438 = vst.msk [vmem:[%s200 + $0x8] sm:$0xf] %vm435, %v433
        %439 = vst.msk [vmem:[%s200 + $0xc] sm:$0xf] %vm435, %v434
      $region36: #{spatial_path_forward.4} parent=27 // pred_fallthru
        _
      %p440 = scmp.lt.s32.totalorder %s18, 1
      %s441 = scalar_select %p440, %s18, 1
      %p442 = scmp.lt.s32.totalorder %s19, 31
      %s443 = scalar_select %p442, %s19, 31
      %s444 = smul.addr %s443, 4
      %s445 = smul.addr %s441, 128
      %s446 = sadd.s32 %s444, %s445
      %s447 = smul.addr %s446, 4
      %s448 = scalar_lea.vmem %s2, %s447
      // Predicated region
      $region37: #{spatial_path_forward.4} parent=27 // pred_check
        %p449 = pneg %p105
      $region38: #{spatial_path_forward.4} parent=27 // pred_check_branch
        %451 = sbr.rel (%p449) target = $region40
      $region39: #{spatial_path_forward.4} parent=27 // pred_region
        _
      $region40: #{spatial_path_forward.4} parent=27 // pred_fallthru
        _
    $region28: #{spatial_path_forward.4} parent=5 // pred_fallthru
      _
    %p452 = scmp.le.s32.totalorder 2, %s8
    // Predicated region
    $region41: #{spatial_path_forward.4} parent=5 // pred_check
      %p453 = pneg %p452
    $region42: #{spatial_path_forward.4} parent=5 // pred_check_branch
      %455 = sbr.rel (%p453) target = $region44
    $region43: #{spatial_path_forward.4} parent=5 // pred_region
      %s456 = ssub.s32 %s8, 2
      // Predicated region
      $region45: #{spatial_path_forward.4} parent=43 // pred_check
        %p457 = pneg %p111
      $region46: #{spatial_path_forward.4} parent=43 // pred_check_branch
        %459 = sbr.rel (%p457) target = $region48
      $region47: #{spatial_path_forward.4} parent=43 // pred_region
        %p460 = scmp.lt.s32.totalorder %s21, 1
        %s461 = scalar_select %p460, %s21, 1
        %p462 = scmp.lt.s32.totalorder %s22, 31
        %s463 = scalar_select %p462, %s22, 31
        %s464 = smul.addr %s463, 4
        %s465 = smul.addr %s461, 128
        %s466 = sadd.s32 %s464, %s465
        %s467 = smul.addr %s466, 4
        %s468 = scalar_lea.vmem %s2, %s467
      $region48: #{spatial_path_forward.4} parent=43 // pred_fallthru
        _
    $region44: #{spatial_path_forward.4} parent=5 // pred_fallthru
      _
  $region6: #{spatial_path_forward.4} parent=0 // loop_footer
    %s12 = sadd.s32 1, %s8
  $region7: #{spatial_path_forward.4} parent=0 // loop_footer_branch
    %7 = sbr.rel target = $region3
  $region8: #{spatial_path_forward.4} parent=0 // loop_exit
    _

// kernel: spatial_path_forward.5
$region0: #{spatial_path_forward.5}
  #allocation0 [shape = 'u32[]', space=smem, size = 0x4, offset = 0x4, fixed_abs, tag = 'smem constant byte address 0x4 - core index']
  #allocation1 [shape = 'u32[72,128]{1,0:T(1,128)}', space=vmem, size = 0x9000, scoped, tag = 'internal scratch']
  #allocation2 [shape = 'f32[16,64]{1,0:T(8,128)}', space=vmem, size = 0x2000, scoped, tag = 'scratch operand']
  %s0 = inlined_call_operand.vmem [shape: bf16[2,34,17,128], index: 0, kind: input, shape index: {}]
  %s1 = inlined_call_operand.vmem [shape: bf16[3,2,128,64], index: 1, kind: input, shape index: {}]
  %s2 = inlined_call_operand.vmem [shape: bf16[2,16,16,64], index: 2, kind: output, shape index: {}]
  %s3 = sld [smem:[#allocation0]]
  $region49: #{spatial_path_forward.5} parent=0
    _
  %s5 = ssub.s32 1, %s3
  %s6 = scalar_select 0, %s5, %s3
  loop: start=0, step=1, limit=98
  $region2: #{spatial_path_forward.5} parent=0 // loop_pre_header
    _
  $region3: #{spatial_path_forward.5} parent=0 // loop_header
    %s8 = sphi 0, %s12
    %p9 = scmp.ge.s32.totalorder %s8, 98
    %s15 = sphi 0, %s34
    %s16 = sphi 0, %s30
    %s17 = sphi 0, %s26
    %s18 = sphi 0, %s15
    %s19 = sphi 0, %s16
    %s20 = sphi 0, %s17
    %s21 = sphi 0, %s18
    %s22 = sphi 0, %s19
    %s23 = sphi 0, %s20
    %s43 = sphi 0, %s45
    %s46 = sphi 0, %s43
    %s47 = sphi 0, %s46
    %s63 = sphi 0, %s47
    %s67 = sphi 0, %s67
    %s69 = sphi 0, %s67
    %s70 = sphi 0, %s69
    %s84 = sphi 0, %s70
    %s92 = sphi 0, %s94
    %s95 = sphi 0, %s92
    %s96 = sphi 0, %s95
    %s112 = sphi 0, %s96
  $region4: #{spatial_path_forward.5} parent=0 // loop_header_branch
    %11 = sbr.rel (%p9) target = $region8
  $region5: #{spatial_path_forward.5} parent=0 // loop_body
    %s13 = ssub.s32 %s8, 1
    %s14 = ssub.s32 %s8, 2
    %s24 = sadd.s32 1, %s17
    %p25 = scmp.ge.s32.totalorder %s24, 3
    %s26 = scalar_select %p25, 0, %s24
    %s27 = sadd.s32 1, %s16
    %s28 = scalar_select %p25, %s27, %s16
    %p29 = scmp.ge.s32.totalorder %s28, 16
    %s30 = scalar_select %p29, 0, %s28
    %s31 = sadd.s32 1, %s15
    %s32 = scalar_select %p29, %s31, %s15
    %p33 = scmp.ge.s32.totalorder %s32, 2
    %s34 = scalar_select %p33, 0, %s32
    %s35 = smul.u32 %s16, 2
    %s36 = sadd.s32 %s35, %s17
    %s37 = smul.u32 %s30, 2
    %s38 = sadd.s32 %s37, %s26
    %s39 = ssub.s32 %s15, %s34
    %s40 = ssub.s32 %s36, %s38
    %s41 = sor.u32 %s39, %s40
    %p42 = scmp.eq.s32.totalorder %s41, 0
    %s44 = sadd.s32 %s43, 1
    %s45 = scalar_select %p42, %s43, %s44
    %p48 = pneg %p42
    %p49 = scmp.eq.s32.totalorder %s8, 95
    %p50 = por %p48, %p49
    %p51 = scmp.ne.s32.totalorder %s43, %s46
    %p52 = scmp.eq.s32.totalorder %s8, 0
    %p53 = por %p51, %p52
    %p54 = scmp.ne.s32.totalorder %s43, %s46
    %p55 = scmp.eq.s32.totalorder %s13, 95
    %p56 = por %p54, %p55
    %p57 = scmp.ne.s32.totalorder %s46, %s47
    %p58 = scmp.eq.s32.totalorder %s13, 0
    %p59 = por %p57, %p58
    %p60 = scmp.ne.s32.totalorder %s46, %s47
    %p61 = scmp.eq.s32.totalorder %s14, 95
    %p62 = por %p60, %p61
    %p64 = scmp.ne.s32.totalorder %s47, %s63
    %p65 = scmp.eq.s32.totalorder %s14, 0
    %p66 = por %p64, %p65
    %s68 = sadd.s32 %s67, 1
    %p71 = scmp.eq.s32.totalorder %s8, 95
    %p72 = scmp.ne.s32.totalorder %s67, %s69
    %p73 = scmp.eq.s32.totalorder %s8, 0
    %p74 = por %p72, %p73
    %p75 = scmp.ne.s32.totalorder %s67, %s69
    %p76 = scmp.eq.s32.totalorder %s13, 95
    %p77 = por %p75, %p76
    %p78 = scmp.ne.s32.totalorder %s69, %s70
    %p79 = scmp.eq.s32.totalorder %s13, 0
    %p80 = por %p78, %p79
    %p81 = scmp.ne.s32.totalorder %s69, %s70
    %p82 = scmp.eq.s32.totalorder %s14, 95
    %p83 = por %p81, %p82
    %p85 = scmp.ne.s32.totalorder %s70, %s84
    %p86 = scmp.eq.s32.totalorder %s14, 0
    %p87 = por %p85, %p86
    %s88 = ssub.s32 %s15, %s34
    %s89 = ssub.s32 %s16, %s30
    %s90 = sor.u32 %s88, %s89
    %p91 = scmp.eq.s32.totalorder %s90, 0
    %s93 = sadd.s32 %s92, 1
    %s94 = scalar_select %p91, %s92, %s93
    %p97 = pneg %p91
    %p98 = scmp.eq.s32.totalorder %s8, 95
    %p99 = por %p97, %p98
    %p100 = scmp.ne.s32.totalorder %s92, %s95
    %p101 = scmp.eq.s32.totalorder %s8, 0
    %p102 = por %p100, %p101
    %p103 = scmp.ne.s32.totalorder %s92, %s95
    %p104 = scmp.eq.s32.totalorder %s13, 95
    %p105 = por %p103, %p104
    %p106 = scmp.ne.s32.totalorder %s95, %s96
    %p107 = scmp.eq.s32.totalorder %s13, 0
    %p108 = por %p106, %p107
    %p109 = scmp.ne.s32.totalorder %s95, %s96
    %p110 = scmp.eq.s32.totalorder %s14, 95
    %p111 = por %p109, %p110
    %p113 = scmp.ne.s32.totalorder %s96, %s112
    %p114 = scmp.eq.s32.totalorder %s14, 0
    %p115 = por %p113, %p114
    %p116 = scmp.le.s32.totalorder 1, %s8
    %p117 = scmp.lt.s32.totalorder %s8, 97
    %p118 = pnand %p116, %p117
    %p119 = pneg %p118
    // Predicated region
    $region9: #{spatial_path_forward.5} parent=5 // pred_check
      _
    $region10: #{spatial_path_forward.5} parent=5 // pred_check_branch
      %121 = sbr.rel (%p118) target = $region12
    $region11: #{spatial_path_forward.5} parent=5 // pred_region
      %s122 = ssub.s32 %s8, 1
      // Predicated region
      $region13: #{spatial_path_forward.5} parent=11 // pred_check
        %p123 = pneg %p80
      $region14: #{spatial_path_forward.5} parent=11 // pred_check_branch
        %125 = sbr.rel (%p123) target = $region16
      $region15: #{spatial_path_forward.5} parent=11 // pred_region
        _
      $region16: #{spatial_path_forward.5} parent=11 // pred_fallthru
        _
    $region12: #{spatial_path_forward.5} parent=5 // pred_fallthru
      _
    %p126 = scmp.lt.s32.totalorder %s8, 96
    // Predicated region
    $region17: #{spatial_path_forward.5} parent=5 // pred_check
      %p127 = pneg %p126
    $region18: #{spatial_path_forward.5} parent=5 // pred_check_branch
      %129 = sbr.rel (%p127) target = $region20
    $region19: #{spatial_path_forward.5} parent=5 // pred_region
      // Predicated region
      $region21: #{spatial_path_forward.5} parent=19 // pred_check
        %p130 = pneg %p53
      $region22: #{spatial_path_forward.5} parent=19 // pred_check_branch
        %132 = sbr.rel (%p130) target = $region24
      $region23: #{spatial_path_forward.5} parent=19 // pred_region
        %s133 = smul.u32 %s16, 2
        %s134 = sadd.s32 %s133, %s17
        %p135 = scmp.lt.s32.totalorder %s15, 1
        %s136 = scalar_select %p135, %s15, 1
        %p137 = scmp.lt.s32.totalorder %s134, 33
        %s138 = scalar_select %p137, %s134, 33
        %s139 = smul.addr %s138, 3
        %s140 = smul.addr %s136, 102
        %s141 = sadd.s32 %s139, %s140
        %s142 = smul.addr %s141, 4
        %s143 = scalar_lea.vmem %s0, %s142
        %s144 = smul.u32 %s16, 2
        %s145 = sadd.s32 %s144, %s17
      $region24: #{spatial_path_forward.5} parent=19 // pred_fallthru
        _
    $region20: #{spatial_path_forward.5} parent=5 // pred_fallthru
      _
    %p146 = scmp.le.s32.totalorder 1, %s8
    %p147 = scmp.lt.s32.totalorder %s8, 97
    %p148 = pnand %p146, %p147
    %p149 = pneg %p148
    // Predicated region
    $region25: #{spatial_path_forward.5} parent=5 // pred_check
      _
    $region26: #{spatial_path_forward.5} parent=5 // pred_check_branch
      %151 = sbr.rel (%p148) target = $region28
    $region27: #{spatial_path_forward.5} parent=5 // pred_region
      %s152 = ssub.s32 %s8, 1
      %s153 = smul.u32 %s19, 2
      %s154 = sadd.s32 %s153, %s20
      %p155 = scmp.lt.s32.totalorder %s18, 1
      %s156 = scalar_select %p155, %s18, 1
      %p157 = scmp.lt.s32.totalorder %s154, 33
      %s158 = scalar_select %p157, %s154, 33
      %s159 = smul.addr %s158, 3
      %s160 = smul.addr %s156, 102
      %s161 = sadd.s32 %s159, %s160
      %s162 = smul.addr %s161, 4
      %s163 = scalar_lea.vmem %s0, %s162
      %p164 = pneg %p59
      %p165 = pneg %p56
      %p166 = pneg %p80
      %p167 = pneg %p77
      %p168 = pneg %p108
      %p169 = pneg %p105
      %p170 = scmp.lt.s32.totalorder %s18, 1
      %s171 = scalar_select %p170, %s18, 1
      %p172 = scmp.lt.s32.totalorder %s19, 15
      %s173 = scalar_select %p172, %s19, 15
      %s174 = smul.addr %s173, 2
      %s175 = smul.addr %s171, 32
      %s176 = sadd.s32 %s174, %s175
      %s177 = smul.addr %s176, 4
      %s178 = scalar_lea.vmem %s2, %s177
      %s179 = smul.u32 %s19, 2
      %s180 = sadd.s32 %s179, %s20
      %p181 = scmp.lt.s32.totalorder %s18, 1
      %s182 = scalar_select %p181, %s18, 1
      %p183 = scmp.lt.s32.totalorder %s180, 33
      %s184 = scalar_select %p183, %s180, 33
      %s185 = smul.addr %s184, 3
      %s186 = smul.addr %s182, 102
      %s187 = sadd.s32 %s185, %s186
      %s188 = smul.addr %s187, 4
      %s189 = scalar_lea.vmem %s0, %s188
      %s190 = smul.u32 %s19, 2
      %s191 = sadd.s32 %s190, %s20
      %p192 = scmp.lt.s32.totalorder %s18, 1
      %s193 = scalar_select %p192, %s18, 1
      %p194 = scmp.lt.s32.totalorder %s19, 15
      %s195 = scalar_select %p194, %s19, 15
      %s196 = smul.addr %s195, 2
      %s197 = smul.addr %s193, 32
      %s198 = sadd.s32 %s196, %s197
      %s199 = smul.addr %s198, 4
      %s200 = scalar_lea.vmem %s2, %s199
      %p201 = scmp.eq.s32.totalorder %s20, 0
      // Predicated region
      $region29: #{spatial_path_forward.5} parent=27 // pred_check
        %p202 = pneg %p201
      $region30: #{spatial_path_forward.5} parent=27 // pred_check_branch
        %204 = sbr.rel (%p202) target = $region32
      $region31: #{spatial_path_forward.5} parent=27 // pred_region
        %vm205 = vcmask 523264
        %206 = vst.msk [vmem:[#allocation2] sm:$0xff] %vm205, 0.0
        %207 = vst.msk [vmem:[#allocation2 + $0x8] sm:$0xff] %vm205, 0.0
      $region32: #{spatial_path_forward.5} parent=27 // pred_fallthru
        _
      %v208 = vld [vmem:[%s189] sm:$0xf]
      %v209 = vld [vmem:[%s189 + $0x4] sm:$0xf]
      %v210 = vld [vmem:[%s189 + $0x8] sm:$0x1]
      %s211 = smul.u32 %s20, 32
      %s212 = smul.addr %s211, 4
      %s213 = scalar_lea.vmem %s1, %s212
      %v214 = vld [vmem:[%s213] sm:$0xf]
      %v215 = vld [vmem:[%s213 + $0x4] sm:$0xf]
      %v216 = vld [vmem:[%s213 + $0x8] sm:$0xf]
      %v217 = vld [vmem:[%s213 + $0xc] sm:$0xf]
      %v218 = vld [vmem:[%s213 + $0x10] sm:$0xf]
      %v219 = vld [vmem:[%s213 + $0x14] sm:$0xf]
      %v220 = vld [vmem:[%s213 + $0x18] sm:$0xf]
      %v221 = vld [vmem:[%s213 + $0x1c] sm:$0xf]
      %v222 = vld [vmem:[%s213 + $0x20] sm:$0xf]
      %v223 = vld [vmem:[%s213 + $0x24] sm:$0xf]
      %v224 = vld [vmem:[%s213 + $0x28] sm:$0xf]
      %v225 = vld [vmem:[%s213 + $0x2c] sm:$0xf]
      %v226 = vld [vmem:[%s213 + $0x30] sm:$0xf]
      %v227 = vld [vmem:[%s213 + $0x34] sm:$0xf]
      %v228 = vld [vmem:[%s213 + $0x38] sm:$0xf]
      %v229 = vld [vmem:[%s213 + $0x3c] sm:$0xf]
      %s230 = sadd.s32 16, %s211
      %s231 = smul.addr %s230, 4
      %s232 = scalar_lea.vmem %s1, %s231
      %v233 = vld [vmem:[%s232] sm:$0xf]
      %v234 = vld [vmem:[%s232 + $0x4] sm:$0xf]
      %v235 = vld [vmem:[%s232 + $0x8] sm:$0xf]
      %v236 = vld [vmem:[%s232 + $0xc] sm:$0xf]
      %v237 = vld [vmem:[%s232 + $0x10] sm:$0xf]
      %v238 = vld [vmem:[%s232 + $0x14] sm:$0xf]
      %v239 = vld [vmem:[%s232 + $0x18] sm:$0xf]
      %v240 = vld [vmem:[%s232 + $0x1c] sm:$0xf]
      %v241 = vld [vmem:[%s232 + $0x20] sm:$0xf]
      %v242 = vld [vmem:[%s232 + $0x24] sm:$0xf]
      %v243 = vld [vmem:[%s232 + $0x28] sm:$0xf]
      %v244 = vld [vmem:[%s232 + $0x2c] sm:$0xf]
      %v245 = vld [vmem:[%s232 + $0x30] sm:$0xf]
      %v246 = vld [vmem:[%s232 + $0x34] sm:$0xf]
      %v247 = vld [vmem:[%s232 + $0x38] sm:$0xf]
      %v248 = vld [vmem:[%s232 + $0x3c] sm:$0xf]
      %v252 = vunpack.c.l.b16 %v208
      %v253 = vunpack.c.l.b16 %v209
      %v254 = vunpack.c.l.b16 %v210
      %v255 = vpack.c.b16 %v253, %v252
      %v256 = vpack.c.b16 %v254, %v254
      %vm257 = vsmask.f32 7424
      %v259 = vshrl.u32 %v255, 16
      %v261 = vshll.u32 %v255, 16
      %v263 = vrot.slane %v261, 1
      %v264 = vor.u32 %v259, %v263
      %v266 = vshll.u32 %v256, 16
      %v268 = vrot.slane %v266, 1
      %v269 = vsel %vm257, %v264, %v268
      %v287 = vunpack.c.l.b16 %v233
      %v288 = vunpack.c.l.b16 %v234
      %v289 = vunpack.c.l.b16 %v235
      %v290 = vunpack.c.l.b16 %v236
      %v291 = vunpack.c.l.b16 %v237
      %v292 = vunpack.c.l.b16 %v238
      %v293 = vunpack.c.l.b16 %v239
      %v294 = vunpack.c.l.b16 %v240
      %v295 = vunpack.c.l.b16 %v241
      %v296 = vunpack.c.l.b16 %v242
      %v297 = vunpack.c.l.b16 %v243
      %v298 = vunpack.c.l.b16 %v244
      %v299 = vunpack.c.l.b16 %v245
      %v300 = vunpack.c.l.b16 %v246
      %v301 = vunpack.c.l.b16 %v247
      %v302 = vunpack.c.l.b16 %v248
      %v303 = vpack.c.b16 %v288, %v287
      %v304 = vpack.c.b16 %v290, %v289
      %v305 = vpack.c.b16 %v292, %v291
      %v306 = vpack.c.b16 %v294, %v293
      %v307 = vpack.c.b16 %v296, %v295
      %v308 = vpack.c.b16 %v298, %v297
      %v309 = vpack.c.b16 %v300, %v299
      %v310 = vpack.c.b16 %v302, %v301
      %319 = vmatpush.bf16.msra.mxu0 %v310
      %320 = vmatpush.bf16.msra.mxu0 %v309
      %321 = vmatpush.bf16.msra.mxu0 %v308
      %322 = vmatpush.bf16.msra.mxu0 %v307
      %323 = vmatpush.bf16.msra.mxu0 %v306
      %324 = vmatpush.bf16.msra.mxu0 %v305
      %325 = vmatpush.bf16.msra.mxu0 %v304
      %326 = vmatpush.bf16.msra.mxu0 %v303
      %327 = vmatmul.bf16.gmra.mxu0 %v269
      %v328 = vpop.f32.mrf.mxu0
      %v329 = vadd.f32 0.0, %v328
      %v330 = vpop.f32.mrf.mxu0
      %v331 = vadd.f32 0.0, %v330
      %332 = vdwg.mxu0
      %v350 = vunpack.c.l.b16 %v214
      %v351 = vunpack.c.l.b16 %v215
      %v352 = vunpack.c.l.b16 %v216
      %v353 = vunpack.c.l.b16 %v217
      %v354 = vunpack.c.l.b16 %v218
      %v355 = vunpack.c.l.b16 %v219
      %v356 = vunpack.c.l.b16 %v220
      %v357 = vunpack.c.l.b16 %v221
      %v358 = vunpack.c.l.b16 %v222
      %v359 = vunpack.c.l.b16 %v223
      %v360 = vunpack.c.l.b16 %v224
      %v361 = vunpack.c.l.b16 %v225
      %v362 = vunpack.c.l.b16 %v226
      %v363 = vunpack.c.l.b16 %v227
      %v364 = vunpack.c.l.b16 %v228
      %v365 = vunpack.c.l.b16 %v229
      %v366 = vpack.c.b16 %v351, %v350
      %v367 = vpack.c.b16 %v353, %v352
      %v368 = vpack.c.b16 %v355, %v354
      %v369 = vpack.c.b16 %v357, %v356
      %v370 = vpack.c.b16 %v359, %v358
      %v371 = vpack.c.b16 %v361, %v360
      %v372 = vpack.c.b16 %v363, %v362
      %v373 = vpack.c.b16 %v365, %v364
      %382 = vmatpush.bf16.msra.mxu0 %v373
      %383 = vmatpush.bf16.msra.mxu0 %v372
      %384 = vmatpush.bf16.msra.mxu0 %v371
      %385 = vmatpush.bf16.msra.mxu0 %v370
      %386 = vmatpush.bf16.msra.mxu0 %v369
      %387 = vmatpush.bf16.msra.mxu0 %v368
      %388 = vmatpush.bf16.msra.mxu0 %v367
      %389 = vmatpush.bf16.msra.mxu0 %v366
      %390 = vmatmul.bf16.gmra.mxu0 %v255
      %v391 = vpop.f32.mrf.mxu0
      %v392 = vadd.f32 %v329, %v391
      %v393 = vpop.f32.mrf.mxu0
      %v394 = vadd.f32 %v331, %v393
      %395 = vdwg.mxu0
      %v396 = vld [vmem:[#allocation2] sm:$0xff]
      %v397 = vld [vmem:[#allocation2 + $0x8] sm:$0xff]
      %v398 = vadd.f32 %v396, %v392
      %v399 = vadd.f32 %v397, %v394
      %vm400 = vcmask 523264
      %401 = vst.msk [vmem:[#allocation2] sm:$0xff] %vm400, %v398
      %402 = vst.msk [vmem:[#allocation2 + $0x8] sm:$0xff] %vm400, %v399
      %p403 = scmp.eq.s32.totalorder %s20, 2
      // Predicated region
      $region33: #{spatial_path_forward.5} parent=27 // pred_check
        %p404 = pneg %p403
      $region34: #{spatial_path_forward.5} parent=27 // pred_check_branch
        %406 = sbr.rel (%p404) target = $region36
      $region35: #{spatial_path_forward.5} parent=27 // pred_region
        %v407 = vld [vmem:[#allocation2] sm:$0xff]
        %v408 = vld [vmem:[#allocation2 + $0x8] sm:$0xff]
        %v409 = vmax.f32 %v407, 0.0
        %v410 = vmax.f32 %v408, 0.0
        %v411 = vpack.c.bf16 %v409, %v409
        %v412 = vpack.c.bf16 %v410, %v410
        %vm413 = vcmask 519168
        %414 = vst.msk [vmem:[%s200] sm:$0xf] %vm413, %v411
        %415 = vst.msk [vmem:[%s200 + $0x4] sm:$0xf] %vm413, %v412
      $region36: #{spatial_path_forward.5} parent=27 // pred_fallthru
        _
      %p416 = scmp.lt.s32.totalorder %s18, 1
      %s417 = scalar_select %p416, %s18, 1
      %p418 = scmp.lt.s32.totalorder %s19, 15
      %s419 = scalar_select %p418, %s19, 15
      %s420 = smul.addr %s419, 2
      %s421 = smul.addr %s417, 32
      %s422 = sadd.s32 %s420, %s421
      %s423 = smul.addr %s422, 4
      %s424 = scalar_lea.vmem %s2, %s423
      // Predicated region
      $region37: #{spatial_path_forward.5} parent=27 // pred_check
        %p425 = pneg %p105
      $region38: #{spatial_path_forward.5} parent=27 // pred_check_branch
        %427 = sbr.rel (%p425) target = $region40
      $region39: #{spatial_path_forward.5} parent=27 // pred_region
        _
      $region40: #{spatial_path_forward.5} parent=27 // pred_fallthru
        _
    $region28: #{spatial_path_forward.5} parent=5 // pred_fallthru
      _
    %p428 = scmp.le.s32.totalorder 2, %s8
    // Predicated region
    $region41: #{spatial_path_forward.5} parent=5 // pred_check
      %p429 = pneg %p428
    $region42: #{spatial_path_forward.5} parent=5 // pred_check_branch
      %431 = sbr.rel (%p429) target = $region44
    $region43: #{spatial_path_forward.5} parent=5 // pred_region
      %s432 = ssub.s32 %s8, 2
      // Predicated region
      $region45: #{spatial_path_forward.5} parent=43 // pred_check
        %p433 = pneg %p111
      $region46: #{spatial_path_forward.5} parent=43 // pred_check_branch
        %435 = sbr.rel (%p433) target = $region48
      $region47: #{spatial_path_forward.5} parent=43 // pred_region
        %p436 = scmp.lt.s32.totalorder %s21, 1
        %s437 = scalar_select %p436, %s21, 1
        %p438 = scmp.lt.s32.totalorder %s22, 15
        %s439 = scalar_select %p438, %s22, 15
        %s440 = smul.addr %s439, 2
        %s441 = smul.addr %s437, 32
        %s442 = sadd.s32 %s440, %s441
        %s443 = smul.addr %s442, 4
        %s444 = scalar_lea.vmem %s2, %s443
      $region48: #{spatial_path_forward.5} parent=43 // pred_fallthru
        _
    $region44: #{spatial_path_forward.5} parent=5 // pred_fallthru
      _
  $region6: #{spatial_path_forward.5} parent=0 // loop_footer
    %s12 = sadd.s32 1, %s8
  $region7: #{spatial_path_forward.5} parent=0 // loop_footer_branch
    %7 = sbr.rel target = $region3
  $region8: #{spatial_path_forward.5} parent=0 // loop_exit
    _

// kernel: spatial_path_forward.6
$region0: #{spatial_path_forward.6}
  #allocation0 [shape = 'u32[]', space=smem, size = 0x4, offset = 0x4, fixed_abs, tag = 'smem constant byte address 0x4 - core index']
  #allocation1 [shape = 'u32[72,128]{1,0:T(1,128)}', space=vmem, size = 0x9000, scoped, tag = 'internal scratch']
  #allocation2 [shape = 'f32[8,64]{1,0:T(8,128)}', space=vmem, size = 0x1000, scoped, tag = 'scratch operand']
  %s0 = inlined_call_operand.vmem [shape: bf16[2,18,9,128], index: 0, kind: input, shape index: {}]
  %s1 = inlined_call_operand.vmem [shape: bf16[3,2,128,64], index: 1, kind: input, shape index: {}]
  %s2 = inlined_call_operand.vmem [shape: bf16[2,8,8,64], index: 2, kind: output, shape index: {}]
  %s3 = sld [smem:[#allocation0]]
  $region49: #{spatial_path_forward.6} parent=0
    _
  %s5 = ssub.s32 1, %s3
  %s6 = scalar_select 0, %s5, %s3
  loop: start=0, step=1, limit=50
  $region2: #{spatial_path_forward.6} parent=0 // loop_pre_header
    _
  $region3: #{spatial_path_forward.6} parent=0 // loop_header
    %s8 = sphi 0, %s12
    %p9 = scmp.ge.s32.totalorder %s8, 50
    %s15 = sphi 0, %s34
    %s16 = sphi 0, %s30
    %s17 = sphi 0, %s26
    %s18 = sphi 0, %s15
    %s19 = sphi 0, %s16
    %s20 = sphi 0, %s17
    %s21 = sphi 0, %s18
    %s22 = sphi 0, %s19
    %s23 = sphi 0, %s20
    %s43 = sphi 0, %s45
    %s46 = sphi 0, %s43
    %s47 = sphi 0, %s46
    %s63 = sphi 0, %s47
    %s67 = sphi 0, %s67
    %s69 = sphi 0, %s67
    %s70 = sphi 0, %s69
    %s84 = sphi 0, %s70
    %s92 = sphi 0, %s94
    %s95 = sphi 0, %s92
    %s96 = sphi 0, %s95
    %s112 = sphi 0, %s96
  $region4: #{spatial_path_forward.6} parent=0 // loop_header_branch
    %11 = sbr.rel (%p9) target = $region8
  $region5: #{spatial_path_forward.6} parent=0 // loop_body
    %s13 = ssub.s32 %s8, 1
    %s14 = ssub.s32 %s8, 2
    %s24 = sadd.s32 1, %s17
    %p25 = scmp.ge.s32.totalorder %s24, 3
    %s26 = scalar_select %p25, 0, %s24
    %s27 = sadd.s32 1, %s16
    %s28 = scalar_select %p25, %s27, %s16
    %p29 = scmp.ge.s32.totalorder %s28, 8
    %s30 = scalar_select %p29, 0, %s28
    %s31 = sadd.s32 1, %s15
    %s32 = scalar_select %p29, %s31, %s15
    %p33 = scmp.ge.s32.totalorder %s32, 2
    %s34 = scalar_select %p33, 0, %s32
    %s35 = smul.u32 %s16, 2
    %s36 = sadd.s32 %s35, %s17
    %s37 = smul.u32 %s30, 2
    %s38 = sadd.s32 %s37, %s26
    %s39 = ssub.s32 %s15, %s34
    %s40 = ssub.s32 %s36, %s38
    %s41 = sor.u32 %s39, %s40
    %p42 = scmp.eq.s32.totalorder %s41, 0
    %s44 = sadd.s32 %s43, 1
    %s45 = scalar_select %p42, %s43, %s44
    %p48 = pneg %p42
    %p49 = scmp.eq.s32.totalorder %s8, 47
    %p50 = por %p48, %p49
    %p51 = scmp.ne.s32.totalorder %s43, %s46
    %p52 = scmp.eq.s32.totalorder %s8, 0
    %p53 = por %p51, %p52
    %p54 = scmp.ne.s32.totalorder %s43, %s46
    %p55 = scmp.eq.s32.totalorder %s13, 47
    %p56 = por %p54, %p55
    %p57 = scmp.ne.s32.totalorder %s46, %s47
    %p58 = scmp.eq.s32.totalorder %s13, 0
    %p59 = por %p57, %p58
    %p60 = scmp.ne.s32.totalorder %s46, %s47
    %p61 = scmp.eq.s32.totalorder %s14, 47
    %p62 = por %p60, %p61
    %p64 = scmp.ne.s32.totalorder %s47, %s63
    %p65 = scmp.eq.s32.totalorder %s14, 0
    %p66 = por %p64, %p65
    %s68 = sadd.s32 %s67, 1
    %p71 = scmp.eq.s32.totalorder %s8, 47
    %p72 = scmp.ne.s32.totalorder %s67, %s69
    %p73 = scmp.eq.s32.totalorder %s8, 0
    %p74 = por %p72, %p73
    %p75 = scmp.ne.s32.totalorder %s67, %s69
    %p76 = scmp.eq.s32.totalorder %s13, 47
    %p77 = por %p75, %p76
    %p78 = scmp.ne.s32.totalorder %s69, %s70
    %p79 = scmp.eq.s32.totalorder %s13, 0
    %p80 = por %p78, %p79
    %p81 = scmp.ne.s32.totalorder %s69, %s70
    %p82 = scmp.eq.s32.totalorder %s14, 47
    %p83 = por %p81, %p82
    %p85 = scmp.ne.s32.totalorder %s70, %s84
    %p86 = scmp.eq.s32.totalorder %s14, 0
    %p87 = por %p85, %p86
    %s88 = ssub.s32 %s15, %s34
    %s89 = ssub.s32 %s16, %s30
    %s90 = sor.u32 %s88, %s89
    %p91 = scmp.eq.s32.totalorder %s90, 0
    %s93 = sadd.s32 %s92, 1
    %s94 = scalar_select %p91, %s92, %s93
    %p97 = pneg %p91
    %p98 = scmp.eq.s32.totalorder %s8, 47
    %p99 = por %p97, %p98
    %p100 = scmp.ne.s32.totalorder %s92, %s95
    %p101 = scmp.eq.s32.totalorder %s8, 0
    %p102 = por %p100, %p101
    %p103 = scmp.ne.s32.totalorder %s92, %s95
    %p104 = scmp.eq.s32.totalorder %s13, 47
    %p105 = por %p103, %p104
    %p106 = scmp.ne.s32.totalorder %s95, %s96
    %p107 = scmp.eq.s32.totalorder %s13, 0
    %p108 = por %p106, %p107
    %p109 = scmp.ne.s32.totalorder %s95, %s96
    %p110 = scmp.eq.s32.totalorder %s14, 47
    %p111 = por %p109, %p110
    %p113 = scmp.ne.s32.totalorder %s96, %s112
    %p114 = scmp.eq.s32.totalorder %s14, 0
    %p115 = por %p113, %p114
    %p116 = scmp.le.s32.totalorder 1, %s8
    %p117 = scmp.lt.s32.totalorder %s8, 49
    %p118 = pnand %p116, %p117
    %p119 = pneg %p118
    // Predicated region
    $region9: #{spatial_path_forward.6} parent=5 // pred_check
      _
    $region10: #{spatial_path_forward.6} parent=5 // pred_check_branch
      %121 = sbr.rel (%p118) target = $region12
    $region11: #{spatial_path_forward.6} parent=5 // pred_region
      %s122 = ssub.s32 %s8, 1
      // Predicated region
      $region13: #{spatial_path_forward.6} parent=11 // pred_check
        %p123 = pneg %p80
      $region14: #{spatial_path_forward.6} parent=11 // pred_check_branch
        %125 = sbr.rel (%p123) target = $region16
      $region15: #{spatial_path_forward.6} parent=11 // pred_region
        _
      $region16: #{spatial_path_forward.6} parent=11 // pred_fallthru
        _
    $region12: #{spatial_path_forward.6} parent=5 // pred_fallthru
      _
    %p126 = scmp.lt.s32.totalorder %s8, 48
    // Predicated region
    $region17: #{spatial_path_forward.6} parent=5 // pred_check
      %p127 = pneg %p126
    $region18: #{spatial_path_forward.6} parent=5 // pred_check_branch
      %129 = sbr.rel (%p127) target = $region20
    $region19: #{spatial_path_forward.6} parent=5 // pred_region
      // Predicated region
      $region21: #{spatial_path_forward.6} parent=19 // pred_check
        %p130 = pneg %p53
      $region22: #{spatial_path_forward.6} parent=19 // pred_check_branch
        %132 = sbr.rel (%p130) target = $region24
      $region23: #{spatial_path_forward.6} parent=19 // pred_region
        %s133 = smul.u32 %s16, 2
        %s134 = sadd.s32 %s133, %s17
        %p135 = scmp.lt.s32.totalorder %s15, 1
        %s136 = scalar_select %p135, %s15, 1
        %p137 = scmp.lt.s32.totalorder %s134, 17
        %s138 = scalar_select %p137, %s134, 17
        %s139 = smul.addr %s138, 2
        %s140 = smul.addr %s136, 36
        %s141 = sadd.s32 %s139, %s140
        %s142 = smul.addr %s141, 4
        %s143 = scalar_lea.vmem %s0, %s142
        %s144 = smul.u32 %s16, 2
        %s145 = sadd.s32 %s144, %s17
      $region24: #{spatial_path_forward.6} parent=19 // pred_fallthru
        _
    $region20: #{spatial_path_forward.6} parent=5 // pred_fallthru
      _
    %p146 = scmp.le.s32.totalorder 1, %s8
    %p147 = scmp.lt.s32.totalorder %s8, 49
    %p148 = pnand %p146, %p147
    %p149 = pneg %p148
    // Predicated region
    $region25: #{spatial_path_forward.6} parent=5 // pred_check
      _
    $region26: #{spatial_path_forward.6} parent=5 // pred_check_branch
      %151 = sbr.rel (%p148) target = $region28
    $region27: #{spatial_path_forward.6} parent=5 // pred_region
      %s152 = ssub.s32 %s8, 1
      %s153 = smul.u32 %s19, 2
      %s154 = sadd.s32 %s153, %s20
      %p155 = scmp.lt.s32.totalorder %s18, 1
      %s156 = scalar_select %p155, %s18, 1
      %p157 = scmp.lt.s32.totalorder %s154, 17
      %s158 = scalar_select %p157, %s154, 17
      %s159 = smul.addr %s158, 2
      %s160 = smul.addr %s156, 36
      %s161 = sadd.s32 %s159, %s160
      %s162 = smul.addr %s161, 4
      %s163 = scalar_lea.vmem %s0, %s162
      %p164 = pneg %p59
      %p165 = pneg %p56
      %p166 = pneg %p80
      %p167 = pneg %p77
      %p168 = pneg %p108
      %p169 = pneg %p105
      %p170 = scmp.lt.s32.totalorder %s18, 1
      %s171 = scalar_select %p170, %s18, 1
      %p172 = scmp.lt.s32.totalorder %s19, 7
      %s173 = scalar_select %p172, %s19, 7
      %s174 = smul.addr %s171, 8
      %s175 = sadd.s32 %s173, %s174
      %s176 = smul.addr %s175, 4
      %s177 = scalar_lea.vmem %s2, %s176
      %s178 = smul.u32 %s19, 2
      %s179 = sadd.s32 %s178, %s20
      %p180 = scmp.lt.s32.totalorder %s18, 1
      %s181 = scalar_select %p180, %s18, 1
      %p182 = scmp.lt.s32.totalorder %s179, 17
      %s183 = scalar_select %p182, %s179, 17
      %s184 = smul.addr %s183, 2
      %s185 = smul.addr %s181, 36
      %s186 = sadd.s32 %s184, %s185
      %s187 = smul.addr %s186, 4
      %s188 = scalar_lea.vmem %s0, %s187
      %s189 = smul.u32 %s19, 2
      %s190 = sadd.s32 %s189, %s20
      %p191 = scmp.lt.s32.totalorder %s18, 1
      %s192 = scalar_select %p191, %s18, 1
      %p193 = scmp.lt.s32.totalorder %s19, 7
      %s194 = scalar_select %p193, %s19, 7
      %s195 = smul.addr %s192, 8
      %s196 = sadd.s32 %s194, %s195
      %s197 = smul.addr %s196, 4
      %s198 = scalar_lea.vmem %s2, %s197
      %p199 = scmp.eq.s32.totalorder %s20, 0
      // Predicated region
      $region29: #{spatial_path_forward.6} parent=27 // pred_check
        %p200 = pneg %p199
      $region30: #{spatial_path_forward.6} parent=27 // pred_check_branch
        %202 = sbr.rel (%p200) target = $region32
      $region31: #{spatial_path_forward.6} parent=27 // pred_region
        %vm203 = vcmask 523264
        %204 = vst.msk [vmem:[#allocation2] sm:$0xff] %vm203, 0.0
      $region32: #{spatial_path_forward.6} parent=27 // pred_fallthru
        _
      %v205 = vld [vmem:[%s188] sm:$0xf]
      %v206 = vld [vmem:[%s188 + $0x4] sm:$0x1]
      %s207 = smul.u32 %s20, 32
      %s208 = smul.addr %s207, 4
      %s209 = scalar_lea.vmem %s1, %s208
      %v210 = vld [vmem:[%s209] sm:$0xf]
      %v211 = vld [vmem:[%s209 + $0x4] sm:$0xf]
      %v212 = vld [vmem:[%s209 + $0x8] sm:$0xf]
      %v213 = vld [vmem:[%s209 + $0xc] sm:$0xf]
      %v214 = vld [vmem:[%s209 + $0x10] sm:$0xf]
      %v215 = vld [vmem:[%s209 + $0x14] sm:$0xf]
      %v216 = vld [vmem:[%s209 + $0x18] sm:$0xf]
      %v217 = vld [vmem:[%s209 + $0x1c] sm:$0xf]
      %v218 = vld [vmem:[%s209 + $0x20] sm:$0xf]
      %v219 = vld [vmem:[%s209 + $0x24] sm:$0xf]
      %v220 = vld [vmem:[%s209 + $0x28] sm:$0xf]
      %v221 = vld [vmem:[%s209 + $0x2c] sm:$0xf]
      %v222 = vld [vmem:[%s209 + $0x30] sm:$0xf]
      %v223 = vld [vmem:[%s209 + $0x34] sm:$0xf]
      %v224 = vld [vmem:[%s209 + $0x38] sm:$0xf]
      %v225 = vld [vmem:[%s209 + $0x3c] sm:$0xf]
      %s226 = sadd.s32 16, %s207
      %s227 = smul.addr %s226, 4
      %s228 = scalar_lea.vmem %s1, %s227
      %v229 = vld [vmem:[%s228] sm:$0xf]
      %v230 = vld [vmem:[%s228 + $0x4] sm:$0xf]
      %v231 = vld [vmem:[%s228 + $0x8] sm:$0xf]
      %v232 = vld [vmem:[%s228 + $0xc] sm:$0xf]
      %v233 = vld [vmem:[%s228 + $0x10] sm:$0xf]
      %v234 = vld [vmem:[%s228 + $0x14] sm:$0xf]
      %v235 = vld [vmem:[%s228 + $0x18] sm:$0xf]
      %v236 = vld [vmem:[%s228 + $0x1c] sm:$0xf]
      %v237 = vld [vmem:[%s228 + $0x20] sm:$0xf]
      %v238 = vld [vmem:[%s228 + $0x24] sm:$0xf]
      %v239 = vld [vmem:[%s228 + $0x28] sm:$0xf]
      %v240 = vld [vmem:[%s228 + $0x2c] sm:$0xf]
      %v241 = vld [vmem:[%s228 + $0x30] sm:$0xf]
      %v242 = vld [vmem:[%s228 + $0x34] sm:$0xf]
      %v243 = vld [vmem:[%s228 + $0x38] sm:$0xf]
      %v244 = vld [vmem:[%s228 + $0x3c] sm:$0xf]
      %v247 = vunpack.c.l.b16 %v205
      %v248 = vunpack.c.l.b16 %v206
      %v249 = vpack.c.b16 %v248, %v247
      %v251 = vshrl.u32 %v249, 16
      %v253 = vshll.u32 %v249, 16
      %v255 = vrot.slane %v253, 1
      %v256 = vor.u32 %v251, %v255
      %v274 = vunpack.c.l.b16 %v229
      %v275 = vunpack.c.l.b16 %v230
      %v276 = vunpack.c.l.b16 %v231
      %v277 = vunpack.c.l.b16 %v232
      %v278 = vunpack.c.l.b16 %v233
      %v279 = vunpack.c.l.b16 %v234
      %v280 = vunpack.c.l.b16 %v235
      %v281 = vunpack.c.l.b16 %v236
      %v282 = vunpack.c.l.b16 %v237
      %v283 = vunpack.c.l.b16 %v238
      %v284 = vunpack.c.l.b16 %v239
      %v285 = vunpack.c.l.b16 %v240
      %v286 = vunpack.c.l.b16 %v241
      %v287 = vunpack.c.l.b16 %v242
      %v288 = vunpack.c.l.b16 %v243
      %v289 = vunpack.c.l.b16 %v244
      %v290 = vpack.c.b16 %v275, %v274
      %v291 = vpack.c.b16 %v277, %v276
      %v292 = vpack.c.b16 %v279, %v278
      %v293 = vpack.c.b16 %v281, %v280
      %v294 = vpack.c.b16 %v283, %v282
      %v295 = vpack.c.b16 %v285, %v284
      %v296 = vpack.c.b16 %v287, %v286
      %v297 = vpack.c.b16 %v289, %v288
      %306 = vmatpush.bf16.msra.mxu0 %v297
      %307 = vmatpush.bf16.msra.mxu0 %v296
      %308 = vmatpush.bf16.msra.mxu0 %v295
      %309 = vmatpush.bf16.msra.mxu0 %v294
      %310 = vmatpush.bf16.msra.mxu0 %v293
      %311 = vmatpush.bf16.msra.mxu0 %v292
      %312 = vmatpush.bf16.msra.mxu0 %v291
      %313 = vmatpush.bf16.msra.mxu0 %v290
      %314 = vmatmul.bf16.gmra.mxu0 %v256
      %v315 = vpop.f32.mrf.mxu0
      %v316 = vadd.f32 0.0, %v315
      %v317 = vpop.f32.mrf.mxu0
      %318 = vdwg.mxu0
      %v335 = vunpack.c.l.b16 %v210
      %v336 = vunpack.c.l.b16 %v211
      %v337 = vunpack.c.l.b16 %v212
      %v338 = vunpack.c.l.b16 %v213
      %v339 = vunpack.c.l.b16 %v214
      %v340 = vunpack.c.l.b16 %v215
      %v341 = vunpack.c.l.b16 %v216
      %v342 = vunpack.c.l.b16 %v217
      %v343 = vunpack.c.l.b16 %v218
      %v344 = vunpack.c.l.b16 %v219
      %v345 = vunpack.c.l.b16 %v220
      %v346 = vunpack.c.l.b16 %v221
      %v347 = vunpack.c.l.b16 %v222
      %v348 = vunpack.c.l.b16 %v223
      %v349 = vunpack.c.l.b16 %v224
      %v350 = vunpack.c.l.b16 %v225
      %v351 = vpack.c.b16 %v336, %v335
      %v352 = vpack.c.b16 %v338, %v337
      %v353 = vpack.c.b16 %v340, %v339
      %v354 = vpack.c.b16 %v342, %v341
      %v355 = vpack.c.b16 %v344, %v343
      %v356 = vpack.c.b16 %v346, %v345
      %v357 = vpack.c.b16 %v348, %v347
      %v358 = vpack.c.b16 %v350, %v349
      %367 = vmatpush.bf16.msra.mxu0 %v358
      %368 = vmatpush.bf16.msra.mxu0 %v357
      %369 = vmatpush.bf16.msra.mxu0 %v356
      %370 = vmatpush.bf16.msra.mxu0 %v355
      %371 = vmatpush.bf16.msra.mxu0 %v354
      %372 = vmatpush.bf16.msra.mxu0 %v353
      %373 = vmatpush.bf16.msra.mxu0 %v352
      %374 = vmatpush.bf16.msra.mxu0 %v351
      %375 = vmatmul.bf16.gmra.mxu0 %v205
      %v376 = vpop.f32.mrf.mxu0
      %v377 = vadd.f32 %v316, %v376
      %v378 = vpop.f32.mrf.mxu0
      %379 = vdwg.mxu0
      %v380 = vld [vmem:[#allocation2] sm:$0xff]
      %v381 = vadd.f32 %v380, %v377
      %vm382 = vcmask 523264
      %383 = vst.msk [vmem:[#allocation2] sm:$0xff] %vm382, %v381
      %p384 = scmp.eq.s32.totalorder %s20, 2
      // Predicated region
      $region33: #{spatial_path_forward.6} parent=27 // pred_check
        %p385 = pneg %p384
      $region34: #{spatial_path_forward.6} parent=27 // pred_check_branch
        %387 = sbr.rel (%p385) target = $region36
      $region35: #{spatial_path_forward.6} parent=27 // pred_region
        %v388 = vld [vmem:[#allocation2] sm:$0xff]
        %v389 = vmax.f32 %v388, 0.0
        %v390 = vpack.c.bf16 %v389, %v389
        %vm391 = vcmask 519168
        %392 = vst.msk [vmem:[%s198] sm:$0xf] %vm391, %v390
      $region36: #{spatial_path_forward.6} parent=27 // pred_fallthru
        _
      %p393 = scmp.lt.s32.totalorder %s18, 1
      %s394 = scalar_select %p393, %s18, 1
      %p395 = scmp.lt.s32.totalorder %s19, 7
      %s396 = scalar_select %p395, %s19, 7
      %s397 = smul.addr %s394, 8
      %s398 = sadd.s32 %s396, %s397
      %s399 = smul.addr %s398, 4
      %s400 = scalar_lea.vmem %s2, %s399
      // Predicated region
      $region37: #{spatial_path_forward.6} parent=27 // pred_check
        %p401 = pneg %p105
      $region38: #{spatial_path_forward.6} parent=27 // pred_check_branch
        %403 = sbr.rel (%p401) target = $region40
      $region39: #{spatial_path_forward.6} parent=27 // pred_region
        _
      $region40: #{spatial_path_forward.6} parent=27 // pred_fallthru
        _
    $region28: #{spatial_path_forward.6} parent=5 // pred_fallthru
      _
    %p404 = scmp.le.s32.totalorder 2, %s8
    // Predicated region
    $region41: #{spatial_path_forward.6} parent=5 // pred_check
      %p405 = pneg %p404
    $region42: #{spatial_path_forward.6} parent=5 // pred_check_branch
      %407 = sbr.rel (%p405) target = $region44
    $region43: #{spatial_path_forward.6} parent=5 // pred_region
      %s408 = ssub.s32 %s8, 2
      // Predicated region
      $region45: #{spatial_path_forward.6} parent=43 // pred_check
        %p409 = pneg %p111
      $region46: #{spatial_path_forward.6} parent=43 // pred_check_branch
        %411 = sbr.rel (%p409) target = $region48
      $region47: #{spatial_path_forward.6} parent=43 // pred_region
        %p412 = scmp.lt.s32.totalorder %s21, 1
        %s413 = scalar_select %p412, %s21, 1
        %p414 = scmp.lt.s32.totalorder %s22, 7
        %s415 = scalar_select %p414, %s22, 7
        %s416 = smul.addr %s413, 8
        %s417 = sadd.s32 %s415, %s416
        %s418 = smul.addr %s417, 4
        %s419 = scalar_lea.vmem %s2, %s418
      $region48: #{spatial_path_forward.6} parent=43 // pred_fallthru
        _
    $region44: #{spatial_path_forward.6} parent=5 // pred_fallthru
      _
  $region6: #{spatial_path_forward.6} parent=0 // loop_footer
    %s12 = sadd.s32 1, %s8
  $region7: #{spatial_path_forward.6} parent=0 // loop_footer_branch
    %7 = sbr.rel target = $region3
  $region8: #{spatial_path_forward.6} parent=0 // loop_exit
    _

// kernel: spatial_path_forward.7
$region0: #{spatial_path_forward.7}
  #allocation0 [shape = 'u32[]', space=smem, size = 0x4, offset = 0x4, fixed_abs, tag = 'smem constant byte address 0x4 - core index']
  #allocation1 [shape = 'u32[72,128]{1,0:T(1,128)}', space=vmem, size = 0x9000, scoped, tag = 'internal scratch']
  %s0 = inlined_call_operand.vmem [shape: bf16[128,64], index: 0, kind: input, shape index: {}]
  %s1 = inlined_call_operand.vmem [shape: bf16[64,128], index: 1, kind: input, shape index: {}]
  %s2 = inlined_call_operand.hbm [shape: f32[128,128], index: 2, kind: output, shape index: {}]
  %s3 = sld [smem:[#allocation0]]
  $region18: #{spatial_path_forward.7} parent=0
    _
  %s5 = ssub.s32 1, %s3
  %s6 = scalar_select 0, %s5, %s3
  $region1: #{spatial_path_forward.7} parent=0
    #allocation2 [shape = 'u8[65536]{0}', space=vmem, size = 0x10000, scoped, tag = 'output window, operand 0, single buffered']
    #allocation3 [shape = 's32[1]{0}', space=sflag, size = 0x4, scoped, tag = 'scoped memory for spatial_path_forward.7']
    %7 = vsyncpa [#allocation3], 0
    // Predicated region
    $region2: #{spatial_path_forward.7} parent=1 // pred_check
      _
    $region3: #{spatial_path_forward.7} parent=1 // pred_check_branch
      %9 = sbr.rel (0) target = $region5
    $region4: #{spatial_path_forward.7} parent=1 // pred_region
      _
    $region5: #{spatial_path_forward.7} parent=1 // pred_fallthru
      _
    // Predicated region
    $region6: #{spatial_path_forward.7} parent=1 // pred_check
      _
    $region7: #{spatial_path_forward.7} parent=1 // pred_check_branch
      %11 = sbr.rel (0) target = $region9
    $region8: #{spatial_path_forward.7} parent=1 // pred_region
      _
    $region9: #{spatial_path_forward.7} parent=1 // pred_fallthru
      _
    %v13 = vld [vmem:[%s0] sm:$0xf]
    %v14 = vld [vmem:[%s0 + $0x4] sm:$0xf]
    %v15 = vld [vmem:[%s0 + $0x8] sm:$0xf]
    %v16 = vld [vmem:[%s0 + $0xc] sm:$0xf]
    %v17 = vld [vmem:[%s0 + $0x10] sm:$0xf]
    %v18 = vld [vmem:[%s0 + $0x14] sm:$0xf]
    %v19 = vld [vmem:[%s0 + $0x18] sm:$0xf]
    %v20 = vld [vmem:[%s0 + $0x1c] sm:$0xf]
    %v21 = vld [vmem:[%s0 + $0x20] sm:$0xf]
    %v22 = vld [vmem:[%s0 + $0x24] sm:$0xf]
    %v23 = vld [vmem:[%s0 + $0x28] sm:$0xf]
    %v24 = vld [vmem:[%s0 + $0x2c] sm:$0xf]
    %v25 = vld [vmem:[%s0 + $0x30] sm:$0xf]
    %v26 = vld [vmem:[%s0 + $0x34] sm:$0xf]
    %v27 = vld [vmem:[%s0 + $0x38] sm:$0xf]
    %v28 = vld [vmem:[%s0 + $0x3c] sm:$0xf]
    %v29 = vld [vmem:[%s1] sm:$0xf]
    %v30 = vld [vmem:[%s1 + $0x4] sm:$0xf]
    %v31 = vld [vmem:[%s1 + $0x8] sm:$0xf]
    %v32 = vld [vmem:[%s1 + $0xc] sm:$0xf]
    %v33 = vld [vmem:[%s1 + $0x10] sm:$0xf]
    %v34 = vld [vmem:[%s1 + $0x14] sm:$0xf]
    %v35 = vld [vmem:[%s1 + $0x18] sm:$0xf]
    %v36 = vld [vmem:[%s1 + $0x1c] sm:$0xf]
    %v53 = vunpack.c.l.b16 %v13
    %v54 = vunpack.c.l.b16 %v14
    %v55 = vunpack.c.l.b16 %v15
    %v56 = vunpack.c.l.b16 %v16
    %v57 = vunpack.c.l.b16 %v17
    %v58 = vunpack.c.l.b16 %v18
    %v59 = vunpack.c.l.b16 %v19
    %v60 = vunpack.c.l.b16 %v20
    %v61 = vunpack.c.l.b16 %v21
    %v62 = vunpack.c.l.b16 %v22
    %v63 = vunpack.c.l.b16 %v23
    %v64 = vunpack.c.l.b16 %v24
    %v65 = vunpack.c.l.b16 %v25
    %v66 = vunpack.c.l.b16 %v26
    %v67 = vunpack.c.l.b16 %v27
    %v68 = vunpack.c.l.b16 %v28
    %v69 = vpack.c.b16 %v54, %v53
    %v70 = vpack.c.b16 %v56, %v55
    %v71 = vpack.c.b16 %v58, %v57
    %v72 = vpack.c.b16 %v60, %v59
    %v73 = vpack.c.b16 %v62, %v61
    %v74 = vpack.c.b16 %v64, %v63
    %v75 = vpack.c.b16 %v66, %v65
    %v76 = vpack.c.b16 %v68, %v67
    %v85 = vunpack.c.l.b16 %v29
    %v86 = vunpack.c.l.b16 %v30
    %v87 = vunpack.c.l.b16 %v31
    %v88 = vunpack.c.l.b16 %v32
    %v89 = vunpack.c.l.b16 %v33
    %v90 = vunpack.c.l.b16 %v34
    %v91 = vunpack.c.l.b16 %v35
    %v92 = vunpack.c.l.b16 %v36
    %v93 = vpack.c.b16 %v86, %v85
    %v94 = vpack.c.b16 %v88, %v87
    %v95 = vpack.c.b16 %v90, %v89
    %v96 = vpack.c.b16 %v92, %v91
    %vm101 = vcmask 523264
    %v103 = vsel %vm101, %v69, 0
    %v106 = vsel %vm101, %v70, 0
    %v109 = vsel %vm101, %v71, 0
    %v112 = vsel %vm101, %v72, 0
    %v115 = vsel %vm101, %v73, 0
    %v118 = vsel %vm101, %v74, 0
    %v121 = vsel %vm101, %v75, 0
    %v124 = vsel %vm101, %v76, 0
    %126 = vmatpush.bf16.msra.mxu0 0
    %127 = vmatpush.bf16.msra.mxu0 0
    %128 = vmatpush.bf16.msra.mxu0 0
    %129 = vmatpush.bf16.msra.mxu0 0
    %130 = vmatpush.bf16.msra.mxu0 %v96
    %131 = vmatpush.bf16.msra.mxu0 %v95
    %132 = vmatpush.bf16.msra.mxu0 %v94
    %133 = vmatpush.bf16.msra.mxu0 %v93
    %134 = vmatmul.bf16.gmra.mxu0 %v103
    %v135 = vpop.f32.mrf.mxu0
    %v136 = vadd.f32 0.0, %v135
    %v137 = vpop.f32.mrf.mxu0
    %v138 = vadd.f32 0.0, %v137
    %139 = vmatmul.bf16.gmra.mxu0 %v106
    %v140 = vpop.f32.mrf.mxu0
    %v141 = vadd.f32 0.0, %v140
    %v142 = vpop.f32.mrf.mxu0
    %v143 = vadd.f32 0.0, %v142
    %144 = vmatmul.bf16.gmra.mxu0 %v109
    %v145 = vpop.f32.mrf.mxu0
    %v146 = vadd.f32 0.0, %v145
    %v147 = vpop.f32.mrf.mxu0
    %v148 = vadd.f32 0.0, %v147
    %149 = vmatmul.bf16.gmra.mxu0 %v112
    %v150 = vpop.f32.mrf.mxu0
    %v151 = vadd.f32 0.0, %v150
    %v152 = vpop.f32.mrf.mxu0
    %v153 = vadd.f32 0.0, %v152
    %154 = vmatmul.bf16.gmra.mxu0 %v115
    %v155 = vpop.f32.mrf.mxu0
    %v156 = vadd.f32 0.0, %v155
    %v157 = vpop.f32.mrf.mxu0
    %v158 = vadd.f32 0.0, %v157
    %159 = vmatmul.bf16.gmra.mxu0 %v118
    %v160 = vpop.f32.mrf.mxu0
    %v161 = vadd.f32 0.0, %v160
    %v162 = vpop.f32.mrf.mxu0
    %v163 = vadd.f32 0.0, %v162
    %164 = vmatmul.bf16.gmra.mxu0 %v121
    %v165 = vpop.f32.mrf.mxu0
    %v166 = vadd.f32 0.0, %v165
    %v167 = vpop.f32.mrf.mxu0
    %v168 = vadd.f32 0.0, %v167
    %169 = vmatmul.bf16.gmra.mxu0 %v124
    %v170 = vpop.f32.mrf.mxu0
    %v171 = vadd.f32 0.0, %v170
    %v172 = vpop.f32.mrf.mxu0
    %v173 = vadd.f32 0.0, %v172
    %174 = vdwg.mxu0
    %v175 = vmax.f32 %v136, 0.0
    %v176 = vmax.f32 %v138, 0.0
    %v177 = vmax.f32 %v141, 0.0
    %v178 = vmax.f32 %v143, 0.0
    %v179 = vmax.f32 %v146, 0.0
    %v180 = vmax.f32 %v148, 0.0
    %v181 = vmax.f32 %v151, 0.0
    %v182 = vmax.f32 %v153, 0.0
    %v183 = vmax.f32 %v156, 0.0
    %v184 = vmax.f32 %v158, 0.0
    %v185 = vmax.f32 %v161, 0.0
    %v186 = vmax.f32 %v163, 0.0
    %v187 = vmax.f32 %v166, 0.0
    %v188 = vmax.f32 %v168, 0.0
    %v189 = vmax.f32 %v171, 0.0
    %v190 = vmax.f32 %v173, 0.0
    %191 = vst [vmem:[#allocation2] sm:$0xff] %v175
    %192 = vst [vmem:[#allocation2 + $0x8] sm:$0xff] %v176
    %193 = vst [vmem:[#allocation2 + $0x10] sm:$0xff] %v177
    %194 = vst [vmem:[#allocation2 + $0x18] sm:$0xff] %v178
    %195 = vst [vmem:[#allocation2 + $0x20] sm:$0xff] %v179
    %196 = vst [vmem:[#allocation2 + $0x28] sm:$0xff] %v180
    %197 = vst [vmem:[#allocation2 + $0x30] sm:$0xff] %v181
    %198 = vst [vmem:[#allocation2 + $0x38] sm:$0xff] %v182
    %199 = vst [vmem:[#allocation2 + $0x40] sm:$0xff] %v183
    %200 = vst [vmem:[#allocation2 + $0x48] sm:$0xff] %v184
    %201 = vst [vmem:[#allocation2 + $0x50] sm:$0xff] %v185
    %202 = vst [vmem:[#allocation2 + $0x58] sm:$0xff] %v186
    %203 = vst [vmem:[#allocation2 + $0x60] sm:$0xff] %v187
    %204 = vst [vmem:[#allocation2 + $0x68] sm:$0xff] %v188
    %205 = vst [vmem:[#allocation2 + $0x70] sm:$0xff] %v189
    %206 = vst [vmem:[#allocation2 + $0x78] sm:$0xff] %v190
    // Predicated region
    $region10: #{spatial_path_forward.7} parent=1 // pred_check
      _
    $region11: #{spatial_path_forward.7} parent=1 // pred_check_branch
      %208 = sbr.rel (0) target = $region13
    $region12: #{spatial_path_forward.7} parent=1 // pred_region
      %210 = vsyncadd [#allocation3], 0
      %s211 = sshll.u32 [#allocation2], 4
      %s212 = int_to_ptr.vmem [resolvable:$true] %s211
      %s213 = sshll.u32 %s2, 4
      %s214 = int_to_ptr.hbm [resolvable:$true] %s213
      %219 = dma.vmem_to_hbm [thread:$0]  %s212, 2048, %s214, [#allocation3], 128, 128, 8
    $region13: #{spatial_path_forward.7} parent=1 // pred_fallthru
      _
    // Predicated region
    $region14: #{spatial_path_forward.7} parent=1 // pred_check
      _
    $region15: #{spatial_path_forward.7} parent=1 // pred_check_branch
      %221 = sbr.rel (0) target = $region17
    $region16: #{spatial_path_forward.7} parent=1 // pred_region
      %223 = dma.done [#allocation3], 2048
    $region17: #{spatial_path_forward.7} parent=1 // pred_fallthru
      _
    %224 = vsyncpa [#allocation3], 1

</llo_original>
